<compile_context>
chip_gen: v6e
topology: v6e:2x2x1
jax: 0.10.0
libtpu: 0.0.40
codegen_flags: <defaults>
</compile_context>

<pallas_src>
import functools

import jax
import jax.numpy as jnp
import numpy as np
from jax.experimental import pallas as pl
from jax.experimental.pallas import tpu as pltpu


def _round_up(x, m):
    return (x + m - 1) // m * m


# ---------------------------------------------------------------------------
# Fused kernel: hypernets (2 layers each) + mixing, one batch tile per step.
# ---------------------------------------------------------------------------
def _lica_fused_kernel(act_ref, s_ref,
                       w1cat_ref, b1cat_ref,
                       hw1_w2_ref, hw1_b2_ref,
                       hwf_w2_ref, hwf_b2_ref,
                       hb2_w2_ref, hb2_b2_ref,
                       e_ref, r_ref,
                       o_ref):
    edp = hw1_w2_ref.shape[0]           # NA*HID padded to 128 lanes (480 -> 512)
    hidp = r_ref.shape[1]               # HID padded to 128 lanes

    # --- concatenated first hypernet layer: one lane-dense bf16 MXU matmul --
    # column layout: [hw1 hidden | hwf hidden | b1 | hb2 hidden], each segment
    # zero-padded to a multiple of 128 lanes -> all slices below are aligned.
    s_bf = s_ref[...].astype(jnp.bfloat16)                          # (tm, SD)
    y = jnp.dot(s_bf, w1cat_ref[...], preferred_element_type=jnp.float32)
    y = y + b1cat_ref[...]                                          # (tm, edp+3*hidp)

    hw1_h = jnp.maximum(y[:, :edp], 0.0)                            # (tm, edp)
    hwf_h = jnp.maximum(y[:, edp:edp + hidp], 0.0)                  # (tm, hidp)
    b1 = y[:, edp + hidp:edp + 2 * hidp]                            # (tm, hidp)
    hb2_h = jnp.maximum(y[:, edp + 2 * hidp:edp + 3 * hidp], 0.0)   # (tm, hidp)

    # --- second hypernet layers (bf16 operands, f32 accumulation) -----------
    w1 = jnp.dot(hw1_h.astype(jnp.bfloat16), hw1_w2_ref[...],
                 preferred_element_type=jnp.float32)
    w1 = w1 + hw1_b2_ref[...]                                       # (tm, edp); pad lanes 0
    wf = jnp.dot(hwf_h.astype(jnp.bfloat16), hwf_w2_ref[...],
                 preferred_element_type=jnp.float32)
    wf = wf + hwf_b2_ref[...]                                       # (tm, hidp); pad lanes 0
    b2 = jnp.sum(hb2_h * hb2_w2_ref[...], axis=1, keepdims=True)    # (tm, 1)
    b2 = b2 + hb2_b2_ref[...]

    # --- hypernet mixing -----------------------------------------------------
    # h[b, j] = relu( sum_n act[b, n] * w1[b, n*HID + j] + b1[b, j] )
    # via constant 0/1 expand/reduce matmuls (exact in bf16).
    act_e = jnp.dot(act_ref[...].astype(jnp.bfloat16), e_ref[...],
                    preferred_element_type=jnp.float32)             # (tm, edp)
    h_pre = jnp.dot((act_e * w1).astype(jnp.bfloat16), r_ref[...],
                    preferred_element_type=jnp.float32)             # (tm, hidp)
    h = jnp.maximum(h_pre + b1, 0.0)                                # pad lanes stay 0
    q = jnp.sum(h * wf, axis=1, keepdims=True) + b2                 # (tm, 1)
    o_ref[...] = q.astype(o_ref.dtype)


# ---------------------------------------------------------------------------
# Wrapper: row-tiled grid, full-extent weight blocks, parallel semantics.
# ---------------------------------------------------------------------------
def lica_critic_forward(act, states, params, *, tm=1024):
    """act: (bs, seq, n_agents, n_actions); states: (bs, seq, state_dim)."""
    bs, seq = states.shape[0], states.shape[1]
    w1cat = params["w1cat"]
    sd, wcat_n = w1cat.shape
    na, edp = params["e"].shape
    hidp = params["r"].shape[1]

    b = bs * seq
    s = states.reshape(b, sd).astype(jnp.float32)
    a = act.reshape(b, na).astype(jnp.float32)

    # Row-tile the grid.  tm must be a multiple of 8 ((8,128) constraint), and
    # the grid should have >=2 steps when possible so v7x's two TensorCores
    # both get work under dimension_semantics=("parallel",).
    tm = max(8, _round_up(tm, 8))
    if b > 8:
        tm = min(tm, _round_up(pl.cdiv(b, 2), 8))
    tm = min(tm, _round_up(b, 8))
    bp = _round_up(b, tm)
    if bp != b:
        s = jnp.pad(s, ((0, bp - b), (0, 0)))
        a = jnp.pad(a, ((0, bp - b), (0, 0)))

    weights = (
        params["w1cat"], params["b1cat"],
        params["hw1_w2p"], params["hw1_b2"],
        params["hwf_w2p"], params["hwf_b2p"],
        params["hb2_w2row"], params["hb2_b2"],
        params["e"], params["r"],
    )

    def _tile(shape):
        return pl.BlockSpec(shape, lambda i: (i, 0))

    def _rep(x):
        return pl.BlockSpec(x.shape, lambda i: (0, 0))

    flops = 2 * bp * (sd * wcat_n + edp * edp + hidp * hidp + na * edp
                      + edp * hidp) + 12 * bp * (edp + hidp)
    param_bytes = int(sum(int(np.prod(w.shape)) * w.dtype.itemsize for w in weights))
    bytes_accessed = 4 * bp * (sd + na + 1) + param_bytes

    q = pl.pallas_call(
        _lica_fused_kernel,
        out_shape=jax.ShapeDtypeStruct((bp, 1), jnp.float32),
        grid=(bp // tm,),
        in_specs=[_tile((tm, na)), _tile((tm, sd))] + [_rep(w) for w in weights],
        out_specs=_tile((tm, 1)),
        compiler_params=pltpu.CompilerParams(
            dimension_semantics=("parallel",),          # megacore sharding on v7x
            vmem_limit_bytes=48 * 1024 * 1024,          # fits v7x 64 MiB physical VMEM
        ),
        cost_estimate=pl.CostEstimate(
            flops=int(flops), transcendentals=0,
            bytes_accessed=int(bytes_accessed)),
    )(a, s, *weights)

    return q[:b].reshape(bs, -1, 1)


# ---------------------------------------------------------------------------
# Parameter construction (PyTorch-style init) + packed/padded kernel params.
# ---------------------------------------------------------------------------
def _linear_init(key, fan_in, fan_out):
    k1, k2 = jax.random.split(key)
    lim = 1.0 / np.sqrt(fan_in)
    w = jax.random.uniform(k1, (fan_in, fan_out), jnp.float32, -lim, lim)
    b = jax.random.uniform(k2, (fan_out,), jnp.float32, -lim, lim)
    return w, b


def init_params(key, *, state_dim, n_agents, n_actions, mixing_embed_dim):
    hid = mixing_embed_dim
    na = n_agents * n_actions
    ed = hid * na
    hidp = _round_up(hid, 128)
    edp = _round_up(ed, 128)

    keys = jax.random.split(key, 7)
    hw1_w1, hw1_b1 = _linear_init(keys[0], state_dim, ed)     # hyper_w_1[0]
    hw1_w2, hw1_b2 = _linear_init(keys[1], ed, ed)            # hyper_w_1[2]
    hwf_w1, hwf_b1 = _linear_init(keys[2], state_dim, hid)    # hyper_w_final[0]
    hwf_w2, hwf_b2 = _linear_init(keys[3], hid, hid)          # hyper_w_final[2]
    hb1_w, hb1_b = _linear_init(keys[4], state_dim, hid)      # hyper_b_1
    hb2_w1, hb2_b1 = _linear_init(keys[5], state_dim, hid)    # hyper_b_2[0]
    hb2_w2, hb2_b2 = _linear_init(keys[6], hid, 1)            # hyper_b_2[2]

    # Concatenated, 128-lane-padded first-layer weights/biases.
    wcat_n = edp + 3 * hidp
    w1cat = jnp.zeros((state_dim, wcat_n), jnp.float32)
    w1cat = w1cat.at[:, :ed].set(hw1_w1)
    w1cat = w1cat.at[:, edp:edp + hid].set(hwf_w1)
    w1cat = w1cat.at[:, edp + hidp:edp + hidp + hid].set(hb1_w)
    w1cat = w1cat.at[:, edp + 2 * hidp:edp + 2 * hidp + hid].set(hb2_w1)
    b1cat = jnp.zeros((1, wcat_n), jnp.float32)
    b1cat = b1cat.at[0, :ed].set(hw1_b1)
    b1cat = b1cat.at[0, edp:edp + hid].set(hwf_b1)
    b1cat = b1cat.at[0, edp + hidp:edp + hidp + hid].set(hb1_b)
    b1cat = b1cat.at[0, edp + 2 * hidp:edp + 2 * hidp + hid].set(hb2_b1)

    # Second layers, fully padded to (edp, edp) / (hidp, hidp).  Zero padding
    # guarantees padded lanes of w1 / wf / b1 / hb2 contribute nothing.
    hw1_w2p = jnp.zeros((edp, edp), jnp.float32).at[:ed, :ed].set(hw1_w2)
    hw1_b2p = jnp.zeros((1, edp), jnp.float32).at[0, :ed].set(hw1_b2)
    hwf_w2p = jnp.zeros((hidp, hidp), jnp.float32).at[:hid, :hid].set(hwf_w2)
    hwf_b2p = jnp.zeros((1, hidp), jnp.float32).at[0, :hid].set(hwf_b2)
    hb2_w2row = jnp.zeros((1, hidp), jnp.float32).at[0, :hid].set(hb2_w2[:, 0])
    hb2_b2r = hb2_b2.reshape(1, 1)

    # Constant 0/1 expand / reduce matrices for the bmm mixing (exact in bf16).
    e_np = np.zeros((na, edp), np.float32)
    e_np[np.repeat(np.arange(na), hid), np.arange(ed)] = 1.0
    r_np = np.zeros((edp, hidp), np.float32)
    r_np[np.arange(ed), np.tile(np.arange(hid), na)] = 1.0

    packed = dict(
        # bf16: everything that feeds an MXU matmul
        w1cat=w1cat.astype(jnp.bfloat16),
        hw1_w2p=hw1_w2p.astype(jnp.bfloat16),
        hwf_w2p=hwf_w2p.astype(jnp.bfloat16),
        e=jnp.asarray(e_np, jnp.bfloat16),
        r=jnp.asarray(r_np, jnp.bfloat16),
        # f32: biases and the tiny hb2 second-layer row (elementwise path)
        b1cat=b1cat,
        hw1_b2=hw1_b2p,
        hwf_b2p=hwf_b2p,
        hb2_w2row=hb2_w2row,
        hb2_b2=hb2_b2r,
    )
    raw = dict(
        hw1_w1=hw1_w1, hw1_b1=hw1_b1, hw1_w2=hw1_w2, hw1_b2=hw1_b2,
        hwf_w1=hwf_w1, hwf_b1=hwf_b1, hwf_w2=hwf_w2, hwf_b2=hwf_b2,
        hb1_w=hb1_w, hb1_b=hb1_b,
        hb2_w1=hb2_w1, hb2_b1=hb2_b1, hb2_w2=hb2_w2, hb2_b2=hb2_b2,
    )
    return packed, raw


# ---------------------------------------------------------------------------
# Pure-JAX f32 reference (verification only)
# ---------------------------------------------------------------------------
def ref_forward(act, states, raw, *, n_agents, n_actions, hid):
    bs = states.shape[0]
    sd = raw["hw1_w1"].shape[0]
    na = n_agents * n_actions
    s = states.reshape(-1, sd).astype(jnp.float32)
    a = act.reshape(-1, 1, na).astype(jnp.float32)

    w1 = jnp.maximum(s @ raw["hw1_w1"] + raw["hw1_b1"], 0.0) @ raw["hw1_w2"] + raw["hw1_b2"]
    b1 = (s @ raw["hb1_w"] + raw["hb1_b"]).reshape(-1, 1, hid)
    w1 = w1.reshape(-1, na, hid)
    h = jnp.maximum(jnp.einsum("bqn,bnh->bqh", a, w1) + b1, 0.0)
    wf = (jnp.maximum(s @ raw["hwf_w1"] + raw["hwf_b1"], 0.0)
          @ raw["hwf_w2"] + raw["hwf_b2"]).reshape(-1, hid, 1)
    h2 = jnp.einsum("bqh,bho->bqo", h, wf)
    b2 = (jnp.maximum(s @ raw["hb2_w1"] + raw["hb2_b1"], 0.0)
          @ raw["hb2_w2"] + raw["hb2_b2"]).reshape(-1, 1, 1)
    return (h2 + b2).reshape(bs, -1, 1)


# ---------------------------------------------------------------------------
if __name__ == "__main__":
    bs, seq = 3, 22                    # B = 66 -> exercises row padding + multi-step grid
    n_agents, n_actions = 3, 5
    mixing_embed_dim = 32              # HID
    state_dim = 64

    key = jax.random.PRNGKey(0)
    k_param, k_state, k_act = jax.random.split(key, 3)
    packed, raw = init_params(
        k_param, state_dim=state_dim, n_agents=n_agents,
        n_actions=n_actions, mixing_embed_dim=mixing_embed_dim)

    states = jax.random.normal(k_state, (bs, seq, state_dim), jnp.float32)
    act = jax.nn.softmax(
        jax.random.normal(k_act, (bs, seq, n_agents, n_actions), jnp.float32), axis=-1)

    q_ref = ref_forward(act, states, raw, n_agents=n_agents,
                        n_actions=n_actions, hid=mixing_embed_dim)

    # Default tile (clamped to a 2-step grid here) and a small 5-step-grid tile.
    for tile in (1024, 16):
        fwd = jax.jit(functools.partial(lica_critic_forward, tm=tile))
        q = jax.block_until_ready(fwd(act, states, packed))
        assert q.shape == (bs, seq, 1), q.shape
        # Relaxed tolerance: matmul operands are bf16 (f32 accumulation).
        np.testing.assert_allclose(np.asarray(q), np.asarray(q_ref),
                                   rtol=5e-2, atol=5e-2)

    print("KERNEL_OK")
</pallas_src>

<mosaic_0001>
module attributes {stable_mosaic.version = 11 : i64} {
  func.func @_lica_fused_kernel(%arg0: i32, %arg1: memref<40x15xf32, #tpu.memory_space<vmem>>, %arg2: memref<40x64xf32, #tpu.memory_space<vmem>>, %arg3: memref<64x896xbf16, #tpu.memory_space<vmem>>, %arg4: memref<1x896xf32, #tpu.memory_space<vmem>>, %arg5: memref<512x512xbf16, #tpu.memory_space<vmem>>, %arg6: memref<1x512xf32, #tpu.memory_space<vmem>>, %arg7: memref<128x128xbf16, #tpu.memory_space<vmem>>, %arg8: memref<1x128xf32, #tpu.memory_space<vmem>>, %arg9: memref<1x128xf32, #tpu.memory_space<vmem>>, %arg10: memref<1x1xf32, #tpu.memory_space<vmem>>, %arg11: memref<15x512xbf16, #tpu.memory_space<vmem>>, %arg12: memref<512x128xbf16, #tpu.memory_space<vmem>>, %arg13: memref<40x1xf32, #tpu.memory_space<vmem>>) attributes {dimension_semantics = [#tpu.dimension_semantics<parallel>], iteration_bounds = array<i64: 2>, scalar_prefetch = 0 : i64, scratch_operands = 0 : i64, tpu.core_type = #tpu.core_type<tc>, window_params = [{transform_indices = @transform_0, window_bounds = array<i64: 40, 15>}, {transform_indices = @transform_1, window_bounds = array<i64: 40, 64>}, {pipeline_mode = #tpu.pipeline_mode<synchronous>, transform_indices = @transform_2, window_bounds = array<i64: 64, 896>}, {pipeline_mode = #tpu.pipeline_mode<synchronous>, transform_indices = @transform_3, window_bounds = array<i64: 1, 896>}, {pipeline_mode = #tpu.pipeline_mode<synchronous>, transform_indices = @transform_4, window_bounds = array<i64: 512, 512>}, {pipeline_mode = #tpu.pipeline_mode<synchronous>, transform_indices = @transform_5, window_bounds = array<i64: 1, 512>}, {pipeline_mode = #tpu.pipeline_mode<synchronous>, transform_indices = @transform_6, window_bounds = array<i64: 128, 128>}, {pipeline_mode = #tpu.pipeline_mode<synchronous>, transform_indices = @transform_7, window_bounds = array<i64: 1, 128>}, {pipeline_mode = #tpu.pipeline_mode<synchronous>, transform_indices = @transform_8, window_bounds = array<i64: 1, 128>}, {pipeline_mode = #tpu.pipeline_mode<synchronous>, transform_indices = @transform_9, window_bounds = array<i64: 1, 1>}, {pipeline_mode = #tpu.pipeline_mode<synchronous>, transform_indices = @transform_10, window_bounds = array<i64: 15, 512>}, {pipeline_mode = #tpu.pipeline_mode<synchronous>, transform_indices = @transform_11, window_bounds = array<i64: 512, 128>}, {transform_indices = @transform_12, window_bounds = array<i64: 40, 1>}]} {
    %c0 = arith.constant 0 : index
    %c0_0 = arith.constant 0 : index
    %0 = vector.load %arg2[%c0, %c0_0] : memref<40x64xf32, #tpu.memory_space<vmem>>, vector<40x64xf32>
    %1 = arith.truncf %0 : vector<40x64xf32> to vector<40x64xbf16>
    %c0_1 = arith.constant 0 : index
    %c0_2 = arith.constant 0 : index
    %2 = vector.load %arg3[%c0_1, %c0_2] : memref<64x896xbf16, #tpu.memory_space<vmem>>, vector<64x896xbf16>
    %cst = arith.constant dense<0.000000e+00> : vector<40x896xf32>
    %3 = tpu.matmul %1, %2, %cst {dimension_numbers = #tpu.dot_dimension_numbers<[1], [0], [0], [1], [0, 0, 1, 1], [], []>} : vector<40x64xbf16>, vector<64x896xbf16>, vector<40x896xf32> -> vector<40x896xf32>
    %c0_3 = arith.constant 0 : index
    %c0_4 = arith.constant 0 : index
    %4 = vector.load %arg4[%c0_3, %c0_4] : memref<1x896xf32, #tpu.memory_space<vmem>>, vector<1x896xf32>
    %5 = vector.broadcast %4 : vector<1x896xf32> to vector<40x896xf32>
    %6 = arith.addf %3, %5 : vector<40x896xf32>
    %7 = vector.extract_strided_slice %6 {offsets = [0, 0], sizes = [40, 512], strides = [1, 1]} : vector<40x896xf32> to vector<40x512xf32>
    %cst_5 = arith.constant 0.000000e+00 : f32
    %8 = vector.broadcast %cst_5 : f32 to vector<40x512xf32>
    %9 = arith.maximumf %7, %8 : vector<40x512xf32>
    %10 = vector.extract_strided_slice %6 {offsets = [0, 512], sizes = [40, 128], strides = [1, 1]} : vector<40x896xf32> to vector<40x128xf32>
    %cst_6 = arith.constant 0.000000e+00 : f32
    %11 = vector.broadcast %cst_6 : f32 to vector<40x128xf32>
    %12 = arith.maximumf %10, %11 : vector<40x128xf32>
    %13 = vector.extract_strided_slice %6 {offsets = [0, 640], sizes = [40, 128], strides = [1, 1]} : vector<40x896xf32> to vector<40x128xf32>
    %14 = vector.extract_strided_slice %6 {offsets = [0, 768], sizes = [40, 128], strides = [1, 1]} : vector<40x896xf32> to vector<40x128xf32>
    %cst_7 = arith.constant 0.000000e+00 : f32
    %15 = vector.broadcast %cst_7 : f32 to vector<40x128xf32>
    %16 = arith.maximumf %14, %15 : vector<40x128xf32>
    %17 = arith.truncf %9 : vector<40x512xf32> to vector<40x512xbf16>
    %c0_8 = arith.constant 0 : index
    %c0_9 = arith.constant 0 : index
    %18 = vector.load %arg5[%c0_8, %c0_9] : memref<512x512xbf16, #tpu.memory_space<vmem>>, vector<512x512xbf16>
    %cst_10 = arith.constant dense<0.000000e+00> : vector<40x512xf32>
    %19 = tpu.matmul %17, %18, %cst_10 {dimension_numbers = #tpu.dot_dimension_numbers<[1], [0], [0], [1], [0, 0, 1, 1], [], []>} : vector<40x512xbf16>, vector<512x512xbf16>, vector<40x512xf32> -> vector<40x512xf32>
    %c0_11 = arith.constant 0 : index
    %c0_12 = arith.constant 0 : index
    %20 = vector.load %arg6[%c0_11, %c0_12] : memref<1x512xf32, #tpu.memory_space<vmem>>, vector<1x512xf32>
    %21 = vector.broadcast %20 : vector<1x512xf32> to vector<40x512xf32>
    %22 = arith.addf %19, %21 : vector<40x512xf32>
    %23 = arith.truncf %12 : vector<40x128xf32> to vector<40x128xbf16>
    %c0_13 = arith.constant 0 : index
    %c0_14 = arith.constant 0 : index
    %24 = vector.load %arg7[%c0_13, %c0_14] : memref<128x128xbf16, #tpu.memory_space<vmem>>, vector<128x128xbf16>
    %cst_15 = arith.constant dense<0.000000e+00> : vector<40x128xf32>
    %25 = tpu.matmul %23, %24, %cst_15 {dimension_numbers = #tpu.dot_dimension_numbers<[1], [0], [0], [1], [0, 0, 1, 1], [], []>} : vector<40x128xbf16>, vector<128x128xbf16>, vector<40x128xf32> -> vector<40x128xf32>
    %c0_16 = arith.constant 0 : index
    %c0_17 = arith.constant 0 : index
    %26 = vector.load %arg8[%c0_16, %c0_17] : memref<1x128xf32, #tpu.memory_space<vmem>>, vector<1x128xf32>
    %27 = vector.broadcast %26 : vector<1x128xf32> to vector<40x128xf32>
    %28 = arith.addf %25, %27 : vector<40x128xf32>
    %c0_18 = arith.constant 0 : index
    %c0_19 = arith.constant 0 : index
    %29 = vector.load %arg9[%c0_18, %c0_19] : memref<1x128xf32, #tpu.memory_space<vmem>>, vector<1x128xf32>
    %30 = vector.broadcast %29 : vector<1x128xf32> to vector<40x128xf32>
    %31 = arith.mulf %16, %30 : vector<40x128xf32>
    %cst_20 = arith.constant dense<0.000000e+00> : vector<40xf32>
    %32 = vector.multi_reduction <add>, %31, %cst_20 [1] : vector<40x128xf32> to vector<40xf32>
    %33 = vector.shape_cast %32 : vector<40xf32> to vector<40x1xf32>
    %c0_21 = arith.constant 0 : index
    %c0_22 = arith.constant 0 : index
    %34 = vector.load %arg10[%c0_21, %c0_22] : memref<1x1xf32, #tpu.memory_space<vmem>>, vector<1x1xf32>
    %35 = vector.broadcast %34 : vector<1x1xf32> to vector<40x1xf32>
    %36 = arith.addf %33, %35 : vector<40x1xf32>
    %c0_23 = arith.constant 0 : index
    %c0_24 = arith.constant 0 : index
    %37 = vector.load %arg1[%c0_23, %c0_24] : memref<40x15xf32, #tpu.memory_space<vmem>>, vector<40x15xf32>
    %38 = arith.truncf %37 : vector<40x15xf32> to vector<40x15xbf16>
    %c0_25 = arith.constant 0 : index
    %c0_26 = arith.constant 0 : index
    %39 = vector.load %arg11[%c0_25, %c0_26] : memref<15x512xbf16, #tpu.memory_space<vmem>>, vector<15x512xbf16>
    %cst_27 = arith.constant dense<0.000000e+00> : vector<40x512xf32>
    %40 = tpu.matmul %38, %39, %cst_27 {dimension_numbers = #tpu.dot_dimension_numbers<[1], [0], [0], [1], [0, 0, 1, 1], [], []>} : vector<40x15xbf16>, vector<15x512xbf16>, vector<40x512xf32> -> vector<40x512xf32>
    %41 = arith.mulf %40, %22 : vector<40x512xf32>
    %42 = arith.truncf %41 : vector<40x512xf32> to vector<40x512xbf16>
    %c0_28 = arith.constant 0 : index
    %c0_29 = arith.constant 0 : index
    %43 = vector.load %arg12[%c0_28, %c0_29] : memref<512x128xbf16, #tpu.memory_space<vmem>>, vector<512x128xbf16>
    %cst_30 = arith.constant dense<0.000000e+00> : vector<40x128xf32>
    %44 = tpu.matmul %42, %43, %cst_30 {dimension_numbers = #tpu.dot_dimension_numbers<[1], [0], [0], [1], [0, 0, 1, 1], [], []>} : vector<40x512xbf16>, vector<512x128xbf16>, vector<40x128xf32> -> vector<40x128xf32>
    %45 = arith.addf %44, %13 : vector<40x128xf32>
    %cst_31 = arith.constant 0.000000e+00 : f32
    %46 = vector.broadcast %cst_31 : f32 to vector<40x128xf32>
    %47 = arith.maximumf %45, %46 : vector<40x128xf32>
    %48 = arith.mulf %47, %28 : vector<40x128xf32>
    %cst_32 = arith.constant dense<0.000000e+00> : vector<40xf32>
    %49 = vector.multi_reduction <add>, %48, %cst_32 [1] : vector<40x128xf32> to vector<40xf32>
    %50 = vector.shape_cast %49 : vector<40xf32> to vector<40x1xf32>
    %51 = arith.addf %50, %36 : vector<40x1xf32>
    %c0_33 = arith.constant 0 : index
    %c0_34 = arith.constant 0 : index
    %52 = vector.load %arg13[%c0_33, %c0_34] : memref<40x1xf32, #tpu.memory_space<vmem>>, vector<40x1xf32>
    tpu.vector_store %arg13[%c0_33, %c0_34], %51 {strides = array<i32>} : memref<40x1xf32, #tpu.memory_space<vmem>>, vector<40x1xf32>,
    return
  }
  func.func @transform_0(%arg0: i32) -> (i32, i32) {
    %c0_i32 = arith.constant 0 : i32
    %c0_i32_0 = arith.constant 0 : i32
    return %arg0, %c0_i32 : i32, i32
  }
  func.func @transform_1(%arg0: i32) -> (i32, i32) {
    %c0_i32 = arith.constant 0 : i32
    %c0_i32_0 = arith.constant 0 : i32
    return %arg0, %c0_i32 : i32, i32
  }
  func.func @transform_2(%arg0: i32) -> (i32, i32) {
    %c0_i32 = arith.constant 0 : i32
    %c0_i32_0 = arith.constant 0 : i32
    %c0_i32_1 = arith.constant 0 : i32
    return %c0_i32, %c0_i32_0 : i32, i32
  }
  func.func @transform_3(%arg0: i32) -> (i32, i32) {
    %c0_i32 = arith.constant 0 : i32
    %c0_i32_0 = arith.constant 0 : i32
    %c0_i32_1 = arith.constant 0 : i32
    return %c0_i32, %c0_i32_0 : i32, i32
  }
  func.func @transform_4(%arg0: i32) -> (i32, i32) {
    %c0_i32 = arith.constant 0 : i32
    %c0_i32_0 = arith.constant 0 : i32
    %c0_i32_1 = arith.constant 0 : i32
    return %c0_i32, %c0_i32_0 : i32, i32
  }
  func.func @transform_5(%arg0: i32) -> (i32, i32) {
    %c0_i32 = arith.constant 0 : i32
    %c0_i32_0 = arith.constant 0 : i32
    %c0_i32_1 = arith.constant 0 : i32
    return %c0_i32, %c0_i32_0 : i32, i32
  }
  func.func @transform_6(%arg0: i32) -> (i32, i32) {
    %c0_i32 = arith.constant 0 : i32
    %c0_i32_0 = arith.constant 0 : i32
    %c0_i32_1 = arith.constant 0 : i32
    return %c0_i32, %c0_i32_0 : i32, i32
  }
  func.func @transform_7(%arg0: i32) -> (i32, i32) {
    %c0_i32 = arith.constant 0 : i32
    %c0_i32_0 = arith.constant 0 : i32
    %c0_i32_1 = arith.constant 0 : i32
    return %c0_i32, %c0_i32_0 : i32, i32
  }
  func.func @transform_8(%arg0: i32) -> (i32, i32) {
    %c0_i32 = arith.constant 0 : i32
    %c0_i32_0 = arith.constant 0 : i32
    %c0_i32_1 = arith.constant 0 : i32
    return %c0_i32, %c0_i32_0 : i32, i32
  }
  func.func @transform_9(%arg0: i32) -> (i32, i32) {
    %c0_i32 = arith.constant 0 : i32
    %c0_i32_0 = arith.constant 0 : i32
    %c0_i32_1 = arith.constant 0 : i32
    return %c0_i32, %c0_i32_0 : i32, i32
  }
  func.func @transform_10(%arg0: i32) -> (i32, i32) {
    %c0_i32 = arith.constant 0 : i32
    %c0_i32_0 = arith.constant 0 : i32
    %c0_i32_1 = arith.constant 0 : i32
    return %c0_i32, %c0_i32_0 : i32, i32
  }
  func.func @transform_11(%arg0: i32) -> (i32, i32) {
    %c0_i32 = arith.constant 0 : i32
    %c0_i32_0 = arith.constant 0 : i32
    %c0_i32_1 = arith.constant 0 : i32
    return %c0_i32, %c0_i32_0 : i32, i32
  }
  func.func @transform_12(%arg0: i32) -> (i32, i32) {
    %c0_i32 = arith.constant 0 : i32
    %c0_i32_0 = arith.constant 0 : i32
    return %arg0, %c0_i32 : i32, i32
  }
}

</mosaic_0001>

<llo_original>
// kernel: lica_critic_forward.1
$region0: #{lica_critic_forward.1}
  #allocation0 [shape = 'u32[]', space=smem, size = 0x4, offset = 0x4, fixed_abs, tag = 'smem constant byte address 0x4 - core index']
  #allocation1 [shape = 'u32[144,128]{1,0:T(1,128)}', space=vmem, size = 0x12000, scoped, tag = 'internal scratch']
  #allocation2 [shape = 'f32[1,1]{1,0:T(1,128)S(1)}', space=vmem, size = 0x200, scoped, tag = 'scoped memory for lica_critic_forward.1']
  %s0 = inlined_call_operand.vmem [shape: f32[80,15], index: 0, kind: input, shape index: {}]
  %s1 = inlined_call_operand.vmem [shape: f32[80,64], index: 1, kind: input, shape index: {}]
  %s2 = inlined_call_operand.vmem [shape: bf16[64,896], index: 2, kind: input, shape index: {}]
  %s3 = inlined_call_operand.vmem [shape: f32[1,896], index: 3, kind: input, shape index: {}]
  %s4 = inlined_call_operand.hbm [shape: bf16[512,512], index: 4, kind: input, shape index: {}]
  %s5 = inlined_call_operand.vmem [shape: f32[1,512], index: 5, kind: input, shape index: {}]
  %s6 = inlined_call_operand.vmem [shape: bf16[128,128], index: 6, kind: input, shape index: {}]
  %s7 = inlined_call_operand.vmem [shape: f32[1,128], index: 7, kind: input, shape index: {}]
  %s8 = inlined_call_operand.vmem [shape: f32[1,128], index: 8, kind: input, shape index: {}]
  %s9 = inlined_call_operand.<no memory space> [shape: f32[1,1], index: 9, kind: input, shape index: {}]
  %s10 = inlined_call_operand.vmem [shape: bf16[15,512], index: 10, kind: input, shape index: {}]
  %s11 = inlined_call_operand.vmem [shape: bf16[512,128], index: 11, kind: input, shape index: {}]
  %s12 = inlined_call_operand.vmem [shape: f32[80,1], index: 12, kind: output, shape index: {}]
  %s13 = sld [smem:[#allocation0]]
  $region85: #{lica_critic_forward.1} parent=0
    _
  %s15 = ssub.s32 1, %s13
  %s16 = scalar_select 0, %s15, %s13
  %v17 = vstv %s9
  %18 = vst [vmem:[#allocation2] sm:$0x1] %v17
  $region1: #{lica_critic_forward.1} parent=0
    #allocation3 [shape = 'u8[524288]{0}', space=vmem, size = 0x80000, scoped, tag = 'input window, operand 4, single buffered']
    #allocation4 [shape = 's32[2]{0}', space=sflag, size = 0x8, scoped, tag = 'scoped memory for lica_critic_forward.1']
    %19 = vsyncpa [#allocation4], 0
    loop: start=0, step=1, limit=4
    $region2: #{lica_critic_forward.1} parent=1 // loop_pre_header
      _
    $region3: #{lica_critic_forward.1} parent=1 // loop_header
      %s21 = sphi 0, %s25
      %p22 = scmp.ge.s32.totalorder %s21, 4
      %s31 = sphi 0, %s33
      %s34 = sphi 0, %s31
      %s35 = sphi 0, %s34
      %s51 = sphi 0, %s35
      %s57 = sphi 0, %s59
      %s60 = sphi 0, %s57
      %s61 = sphi 0, %s60
      %s77 = sphi 0, %s61
      %s81 = sphi 0, %s81
      %s83 = sphi 0, %s81
      %s84 = sphi 0, %s83
      %s98 = sphi 0, %s84
      %s102 = sphi 0, %s102
      %s104 = sphi 0, %s102
      %s105 = sphi 0, %s104
      %s119 = sphi 0, %s105
      %s123 = sphi 0, %s123
      %s125 = sphi 0, %s123
      %s126 = sphi 0, %s125
      %s140 = sphi 0, %s126
      %s144 = sphi 0, %s144
      %s146 = sphi 0, %s144
      %s147 = sphi 0, %s146
      %s161 = sphi 0, %s147
      %s165 = sphi 0, %s165
      %s167 = sphi 0, %s165
      %s168 = sphi 0, %s167
      %s182 = sphi 0, %s168
      %s186 = sphi 0, %s186
      %s188 = sphi 0, %s186
      %s189 = sphi 0, %s188
      %s203 = sphi 0, %s189
      %s207 = sphi 0, %s207
      %s209 = sphi 0, %s207
      %s210 = sphi 0, %s209
      %s224 = sphi 0, %s210
      %s228 = sphi 0, %s228
      %s230 = sphi 0, %s228
      %s231 = sphi 0, %s230
      %s245 = sphi 0, %s231
      %s249 = sphi 0, %s249
      %s251 = sphi 0, %s249
      %s252 = sphi 0, %s251
      %s266 = sphi 0, %s252
      %s270 = sphi 0, %s270
      %s272 = sphi 0, %s270
      %s273 = sphi 0, %s272
      %s287 = sphi 0, %s273
      %s293 = sphi 0, %s295
      %s296 = sphi 0, %s293
      %s297 = sphi 0, %s296
      %s313 = sphi 0, %s297
    $region4: #{lica_critic_forward.1} parent=1 // loop_header_branch
      %24 = sbr.rel (%p22) target = $region8
    $region5: #{lica_critic_forward.1} parent=1 // loop_body
      %s26 = ssub.s32 %s21, 1
      %s27 = ssub.s32 %s21, 2
      %s28 = sadd.s32 %s21, 1
      %s29 = ssub.s32 %s21, %s28
      %p30 = scmp.eq.s32.totalorder %s29, 0
      %s32 = sadd.s32 %s31, 1
      %s33 = scalar_select %p30, %s31, %s32
      %p36 = pneg %p30
      %p37 = scmp.eq.s32.totalorder %s21, 1
      %p38 = por %p36, %p37
      %p39 = scmp.ne.s32.totalorder %s31, %s34
      %p40 = scmp.eq.s32.totalorder %s21, 0
      %p41 = por %p39, %p40
      %p42 = scmp.ne.s32.totalorder %s31, %s34
      %p43 = scmp.eq.s32.totalorder %s26, 1
      %p44 = por %p42, %p43
      %p45 = scmp.ne.s32.totalorder %s34, %s35
      %p46 = scmp.eq.s32.totalorder %s26, 0
      %p47 = por %p45, %p46
      %p48 = scmp.ne.s32.totalorder %s34, %s35
      %p49 = scmp.eq.s32.totalorder %s27, 1
      %p50 = por %p48, %p49
      %p52 = scmp.ne.s32.totalorder %s35, %s51
      %p53 = scmp.eq.s32.totalorder %s27, 0
      %p54 = por %p52, %p53
      %s55 = ssub.s32 %s21, %s28
      %p56 = scmp.eq.s32.totalorder %s55, 0
      %s58 = sadd.s32 %s57, 1
      %s59 = scalar_select %p56, %s57, %s58
      %p62 = pneg %p56
      %p63 = scmp.eq.s32.totalorder %s21, 1
      %p64 = por %p62, %p63
      %p65 = scmp.ne.s32.totalorder %s57, %s60
      %p66 = scmp.eq.s32.totalorder %s21, 0
      %p67 = por %p65, %p66
      %p68 = scmp.ne.s32.totalorder %s57, %s60
      %p69 = scmp.eq.s32.totalorder %s26, 1
      %p70 = por %p68, %p69
      %p71 = scmp.ne.s32.totalorder %s60, %s61
      %p72 = scmp.eq.s32.totalorder %s26, 0
      %p73 = por %p71, %p72
      %p74 = scmp.ne.s32.totalorder %s60, %s61
      %p75 = scmp.eq.s32.totalorder %s27, 1
      %p76 = por %p74, %p75
      %p78 = scmp.ne.s32.totalorder %s61, %s77
      %p79 = scmp.eq.s32.totalorder %s27, 0
      %p80 = por %p78, %p79
      %s82 = sadd.s32 %s81, 1
      %p85 = scmp.eq.s32.totalorder %s21, 1
      %p86 = scmp.ne.s32.totalorder %s81, %s83
      %p87 = scmp.eq.s32.totalorder %s21, 0
      %p88 = por %p86, %p87
      %p89 = scmp.ne.s32.totalorder %s81, %s83
      %p90 = scmp.eq.s32.totalorder %s26, 1
      %p91 = por %p89, %p90
      %p92 = scmp.ne.s32.totalorder %s83, %s84
      %p93 = scmp.eq.s32.totalorder %s26, 0
      %p94 = por %p92, %p93
      %p95 = scmp.ne.s32.totalorder %s83, %s84
      %p96 = scmp.eq.s32.totalorder %s27, 1
      %p97 = por %p95, %p96
      %p99 = scmp.ne.s32.totalorder %s84, %s98
      %p100 = scmp.eq.s32.totalorder %s27, 0
      %p101 = por %p99, %p100
      %s103 = sadd.s32 %s102, 1
      %p106 = scmp.eq.s32.totalorder %s21, 1
      %p107 = scmp.ne.s32.totalorder %s102, %s104
      %p108 = scmp.eq.s32.totalorder %s21, 0
      %p109 = por %p107, %p108
      %p110 = scmp.ne.s32.totalorder %s102, %s104
      %p111 = scmp.eq.s32.totalorder %s26, 1
      %p112 = por %p110, %p111
      %p113 = scmp.ne.s32.totalorder %s104, %s105
      %p114 = scmp.eq.s32.totalorder %s26, 0
      %p115 = por %p113, %p114
      %p116 = scmp.ne.s32.totalorder %s104, %s105
      %p117 = scmp.eq.s32.totalorder %s27, 1
      %p118 = por %p116, %p117
      %p120 = scmp.ne.s32.totalorder %s105, %s119
      %p121 = scmp.eq.s32.totalorder %s27, 0
      %p122 = por %p120, %p121
      %s124 = sadd.s32 %s123, 1
      %p127 = scmp.eq.s32.totalorder %s21, 1
      %p128 = scmp.ne.s32.totalorder %s123, %s125
      %p129 = scmp.eq.s32.totalorder %s21, 0
      %p130 = por %p128, %p129
      %p131 = scmp.ne.s32.totalorder %s123, %s125
      %p132 = scmp.eq.s32.totalorder %s26, 1
      %p133 = por %p131, %p132
      %p134 = scmp.ne.s32.totalorder %s125, %s126
      %p135 = scmp.eq.s32.totalorder %s26, 0
      %p136 = por %p134, %p135
      %p137 = scmp.ne.s32.totalorder %s125, %s126
      %p138 = scmp.eq.s32.totalorder %s27, 1
      %p139 = por %p137, %p138
      %p141 = scmp.ne.s32.totalorder %s126, %s140
      %p142 = scmp.eq.s32.totalorder %s27, 0
      %p143 = por %p141, %p142
      %s145 = sadd.s32 %s144, 1
      %p148 = scmp.eq.s32.totalorder %s21, 1
      %p149 = scmp.ne.s32.totalorder %s144, %s146
      %p150 = scmp.eq.s32.totalorder %s21, 0
      %p151 = por %p149, %p150
      %p152 = scmp.ne.s32.totalorder %s144, %s146
      %p153 = scmp.eq.s32.totalorder %s26, 1
      %p154 = por %p152, %p153
      %p155 = scmp.ne.s32.totalorder %s146, %s147
      %p156 = scmp.eq.s32.totalorder %s26, 0
      %p157 = por %p155, %p156
      %p158 = scmp.ne.s32.totalorder %s146, %s147
      %p159 = scmp.eq.s32.totalorder %s27, 1
      %p160 = por %p158, %p159
      %p162 = scmp.ne.s32.totalorder %s147, %s161
      %p163 = scmp.eq.s32.totalorder %s27, 0
      %p164 = por %p162, %p163
      %s166 = sadd.s32 %s165, 1
      %p169 = scmp.eq.s32.totalorder %s21, 1
      %p170 = scmp.ne.s32.totalorder %s165, %s167
      %p171 = scmp.eq.s32.totalorder %s21, 0
      %p172 = por %p170, %p171
      %p173 = scmp.ne.s32.totalorder %s165, %s167
      %p174 = scmp.eq.s32.totalorder %s26, 1
      %p175 = por %p173, %p174
      %p176 = scmp.ne.s32.totalorder %s167, %s168
      %p177 = scmp.eq.s32.totalorder %s26, 0
      %p178 = por %p176, %p177
      %p179 = scmp.ne.s32.totalorder %s167, %s168
      %p180 = scmp.eq.s32.totalorder %s27, 1
      %p181 = por %p179, %p180
      %p183 = scmp.ne.s32.totalorder %s168, %s182
      %p184 = scmp.eq.s32.totalorder %s27, 0
      %p185 = por %p183, %p184
      %s187 = sadd.s32 %s186, 1
      %p190 = scmp.eq.s32.totalorder %s21, 1
      %p191 = scmp.ne.s32.totalorder %s186, %s188
      %p192 = scmp.eq.s32.totalorder %s21, 0
      %p193 = por %p191, %p192
      %p194 = scmp.ne.s32.totalorder %s186, %s188
      %p195 = scmp.eq.s32.totalorder %s26, 1
      %p196 = por %p194, %p195
      %p197 = scmp.ne.s32.totalorder %s188, %s189
      %p198 = scmp.eq.s32.totalorder %s26, 0
      %p199 = por %p197, %p198
      %p200 = scmp.ne.s32.totalorder %s188, %s189
      %p201 = scmp.eq.s32.totalorder %s27, 1
      %p202 = por %p200, %p201
      %p204 = scmp.ne.s32.totalorder %s189, %s203
      %p205 = scmp.eq.s32.totalorder %s27, 0
      %p206 = por %p204, %p205
      %s208 = sadd.s32 %s207, 1
      %p211 = scmp.eq.s32.totalorder %s21, 1
      %p212 = scmp.ne.s32.totalorder %s207, %s209
      %p213 = scmp.eq.s32.totalorder %s21, 0
      %p214 = por %p212, %p213
      %p215 = scmp.ne.s32.totalorder %s207, %s209
      %p216 = scmp.eq.s32.totalorder %s26, 1
      %p217 = por %p215, %p216
      %p218 = scmp.ne.s32.totalorder %s209, %s210
      %p219 = scmp.eq.s32.totalorder %s26, 0
      %p220 = por %p218, %p219
      %p221 = scmp.ne.s32.totalorder %s209, %s210
      %p222 = scmp.eq.s32.totalorder %s27, 1
      %p223 = por %p221, %p222
      %p225 = scmp.ne.s32.totalorder %s210, %s224
      %p226 = scmp.eq.s32.totalorder %s27, 0
      %p227 = por %p225, %p226
      %s229 = sadd.s32 %s228, 1
      %p232 = scmp.eq.s32.totalorder %s21, 1
      %p233 = scmp.ne.s32.totalorder %s228, %s230
      %p234 = scmp.eq.s32.totalorder %s21, 0
      %p235 = por %p233, %p234
      %p236 = scmp.ne.s32.totalorder %s228, %s230
      %p237 = scmp.eq.s32.totalorder %s26, 1
      %p238 = por %p236, %p237
      %p239 = scmp.ne.s32.totalorder %s230, %s231
      %p240 = scmp.eq.s32.totalorder %s26, 0
      %p241 = por %p239, %p240
      %p242 = scmp.ne.s32.totalorder %s230, %s231
      %p243 = scmp.eq.s32.totalorder %s27, 1
      %p244 = por %p242, %p243
      %p246 = scmp.ne.s32.totalorder %s231, %s245
      %p247 = scmp.eq.s32.totalorder %s27, 0
      %p248 = por %p246, %p247
      %s250 = sadd.s32 %s249, 1
      %p253 = scmp.eq.s32.totalorder %s21, 1
      %p254 = scmp.ne.s32.totalorder %s249, %s251
      %p255 = scmp.eq.s32.totalorder %s21, 0
      %p256 = por %p254, %p255
      %p257 = scmp.ne.s32.totalorder %s249, %s251
      %p258 = scmp.eq.s32.totalorder %s26, 1
      %p259 = por %p257, %p258
      %p260 = scmp.ne.s32.totalorder %s251, %s252
      %p261 = scmp.eq.s32.totalorder %s26, 0
      %p262 = por %p260, %p261
      %p263 = scmp.ne.s32.totalorder %s251, %s252
      %p264 = scmp.eq.s32.totalorder %s27, 1
      %p265 = por %p263, %p264
      %p267 = scmp.ne.s32.totalorder %s252, %s266
      %p268 = scmp.eq.s32.totalorder %s27, 0
      %p269 = por %p267, %p268
      %s271 = sadd.s32 %s270, 1
      %p274 = scmp.eq.s32.totalorder %s21, 1
      %p275 = scmp.ne.s32.totalorder %s270, %s272
      %p276 = scmp.eq.s32.totalorder %s21, 0
      %p277 = por %p275, %p276
      %p278 = scmp.ne.s32.totalorder %s270, %s272
      %p279 = scmp.eq.s32.totalorder %s26, 1
      %p280 = por %p278, %p279
      %p281 = scmp.ne.s32.totalorder %s272, %s273
      %p282 = scmp.eq.s32.totalorder %s26, 0
      %p283 = por %p281, %p282
      %p284 = scmp.ne.s32.totalorder %s272, %s273
      %p285 = scmp.eq.s32.totalorder %s27, 1
      %p286 = por %p284, %p285
      %p288 = scmp.ne.s32.totalorder %s273, %s287
      %p289 = scmp.eq.s32.totalorder %s27, 0
      %p290 = por %p288, %p289
      %s291 = ssub.s32 %s21, %s28
      %p292 = scmp.eq.s32.totalorder %s291, 0
      %s294 = sadd.s32 %s293, 1
      %s295 = scalar_select %p292, %s293, %s294
      %p298 = pneg %p292
      %p299 = scmp.eq.s32.totalorder %s21, 1
      %p300 = por %p298, %p299
      %p301 = scmp.ne.s32.totalorder %s293, %s296
      %p302 = scmp.eq.s32.totalorder %s21, 0
      %p303 = por %p301, %p302
      %p304 = scmp.ne.s32.totalorder %s293, %s296
      %p305 = scmp.eq.s32.totalorder %s26, 1
      %p306 = por %p304, %p305
      %p307 = scmp.ne.s32.totalorder %s296, %s297
      %p308 = scmp.eq.s32.totalorder %s26, 0
      %p309 = por %p307, %p308
      %p310 = scmp.ne.s32.totalorder %s296, %s297
      %p311 = scmp.eq.s32.totalorder %s27, 1
      %p312 = por %p310, %p311
      %p314 = scmp.ne.s32.totalorder %s297, %s313
      %p315 = scmp.eq.s32.totalorder %s27, 0
      %p316 = por %p314, %p315
      %p317 = scmp.le.s32.totalorder 1, %s21
      %p318 = scmp.lt.s32.totalorder %s21, 3
      %p319 = pnand %p317, %p318
      %p320 = pneg %p319
      // Predicated region
      $region9: #{lica_critic_forward.1} parent=5 // pred_check
        _
      $region10: #{lica_critic_forward.1} parent=5 // pred_check_branch
        %322 = sbr.rel (%p319) target = $region12
      $region11: #{lica_critic_forward.1} parent=5 // pred_region
        %s323 = ssub.s32 %s21, 1
        // Predicated region
        $region13: #{lica_critic_forward.1} parent=11 // pred_check
          %p324 = pneg %p94
        $region14: #{lica_critic_forward.1} parent=11 // pred_check_branch
          %326 = sbr.rel (%p324) target = $region16
        $region15: #{lica_critic_forward.1} parent=11 // pred_region
          _
        $region16: #{lica_critic_forward.1} parent=11 // pred_fallthru
          _
        // Predicated region
        $region17: #{lica_critic_forward.1} parent=11 // pred_check
          %p327 = pneg %p115
        $region18: #{lica_critic_forward.1} parent=11 // pred_check_branch
          %329 = sbr.rel (%p327) target = $region20
        $region19: #{lica_critic_forward.1} parent=11 // pred_region
          _
        $region20: #{lica_critic_forward.1} parent=11 // pred_fallthru
          _
        // Predicated region
        $region21: #{lica_critic_forward.1} parent=11 // pred_check
          %p330 = pneg %p136
        $region22: #{lica_critic_forward.1} parent=11 // pred_check_branch
          %332 = sbr.rel (%p330) target = $region24
        $region23: #{lica_critic_forward.1} parent=11 // pred_region
          %s334 = ssub.s32 16384, 16384
          %335 = vsyncadd [#allocation4], %s334
          %s336 = sshll.u32 [#allocation3], 4
          %s337 = int_to_ptr.vmem [resolvable:$true] %s336
          %342 = dma.hbm_to_vmem [thread:$0]  %s4, 16384, %s337, [#allocation4], 256, 256, 16
        $region24: #{lica_critic_forward.1} parent=11 // pred_fallthru
          _
        // Predicated region
        $region25: #{lica_critic_forward.1} parent=11 // pred_check
          %p343 = pneg %p157
        $region26: #{lica_critic_forward.1} parent=11 // pred_check_branch
          %345 = sbr.rel (%p343) target = $region28
        $region27: #{lica_critic_forward.1} parent=11 // pred_region
          _
        $region28: #{lica_critic_forward.1} parent=11 // pred_fallthru
          _
        // Predicated region
        $region29: #{lica_critic_forward.1} parent=11 // pred_check
          %p346 = pneg %p178
        $region30: #{lica_critic_forward.1} parent=11 // pred_check_branch
          %348 = sbr.rel (%p346) target = $region32
        $region31: #{lica_critic_forward.1} parent=11 // pred_region
          _
        $region32: #{lica_critic_forward.1} parent=11 // pred_fallthru
          _
        // Predicated region
        $region33: #{lica_critic_forward.1} parent=11 // pred_check
          %p349 = pneg %p199
        $region34: #{lica_critic_forward.1} parent=11 // pred_check_branch
          %351 = sbr.rel (%p349) target = $region36
        $region35: #{lica_critic_forward.1} parent=11 // pred_region
          _
        $region36: #{lica_critic_forward.1} parent=11 // pred_fallthru
          _
        // Predicated region
        $region37: #{lica_critic_forward.1} parent=11 // pred_check
          %p352 = pneg %p220
        $region38: #{lica_critic_forward.1} parent=11 // pred_check_branch
          %354 = sbr.rel (%p352) target = $region40
        $region39: #{lica_critic_forward.1} parent=11 // pred_region
          _
        $region40: #{lica_critic_forward.1} parent=11 // pred_fallthru
          _
        // Predicated region
        $region41: #{lica_critic_forward.1} parent=11 // pred_check
          %p355 = pneg %p241
        $region42: #{lica_critic_forward.1} parent=11 // pred_check_branch
          %357 = sbr.rel (%p355) target = $region44
        $region43: #{lica_critic_forward.1} parent=11 // pred_region
          _
        $region44: #{lica_critic_forward.1} parent=11 // pred_fallthru
          _
        // Predicated region
        $region45: #{lica_critic_forward.1} parent=11 // pred_check
          %p358 = pneg %p262
        $region46: #{lica_critic_forward.1} parent=11 // pred_check_branch
          %360 = sbr.rel (%p358) target = $region48
        $region47: #{lica_critic_forward.1} parent=11 // pred_region
          _
        $region48: #{lica_critic_forward.1} parent=11 // pred_fallthru
          _
        // Predicated region
        $region49: #{lica_critic_forward.1} parent=11 // pred_check
          %p361 = pneg %p283
        $region50: #{lica_critic_forward.1} parent=11 // pred_check_branch
          %363 = sbr.rel (%p361) target = $region52
        $region51: #{lica_critic_forward.1} parent=11 // pred_region
          _
        $region52: #{lica_critic_forward.1} parent=11 // pred_fallthru
          _
      $region12: #{lica_critic_forward.1} parent=5 // pred_fallthru
        _
      %p364 = scmp.lt.s32.totalorder %s21, 2
      // Predicated region
      $region53: #{lica_critic_forward.1} parent=5 // pred_check
        %p365 = pneg %p364
      $region54: #{lica_critic_forward.1} parent=5 // pred_check_branch
        %367 = sbr.rel (%p365) target = $region56
      $region55: #{lica_critic_forward.1} parent=5 // pred_region
        // Predicated region
        $region57: #{lica_critic_forward.1} parent=55 // pred_check
          %p368 = pneg %p41
        $region58: #{lica_critic_forward.1} parent=55 // pred_check_branch
          %370 = sbr.rel (%p368) target = $region60
        $region59: #{lica_critic_forward.1} parent=55 // pred_region
          %s371 = smul.u32 5, %s21
          %p372 = scmp.lt.s32.totalorder %s371, 9
          %s373 = scalar_select %p372, %s371, 9
          %s374 = smul.addr %s373, 8
          %s375 = scalar_lea.vmem %s0, %s374
          %s376 = smul.u32 5, %s21
        $region60: #{lica_critic_forward.1} parent=55 // pred_fallthru
          _
        // Predicated region
        $region61: #{lica_critic_forward.1} parent=55 // pred_check
          %p377 = pneg %p67
        $region62: #{lica_critic_forward.1} parent=55 // pred_check_branch
          %379 = sbr.rel (%p377) target = $region64
        $region63: #{lica_critic_forward.1} parent=55 // pred_region
          %s380 = smul.u32 5, %s21
          %p381 = scmp.lt.s32.totalorder %s380, 9
          %s382 = scalar_select %p381, %s380, 9
          %s383 = smul.addr %s382, 8
          %s384 = scalar_lea.vmem %s1, %s383
          %s385 = smul.u32 5, %s21
        $region64: #{lica_critic_forward.1} parent=55 // pred_fallthru
          _
      $region56: #{lica_critic_forward.1} parent=5 // pred_fallthru
        _
      %p386 = scmp.le.s32.totalorder 1, %s21
      %p387 = scmp.lt.s32.totalorder %s21, 3
      %p388 = pnand %p386, %p387
      %p389 = pneg %p388
      // Predicated region
      $region65: #{lica_critic_forward.1} parent=5 // pred_check
        _
      $region66: #{lica_critic_forward.1} parent=5 // pred_check_branch
        %391 = sbr.rel (%p388) target = $region68
      $region67: #{lica_critic_forward.1} parent=5 // pred_region
        %s392 = ssub.s32 %s21, 1
        // Predicated region
        $region69: #{lica_critic_forward.1} parent=67 // pred_check
          %p393 = pneg %p136
        $region70: #{lica_critic_forward.1} parent=67 // pred_check_branch
          %395 = sbr.rel (%p393) target = $region72
        $region71: #{lica_critic_forward.1} parent=67 // pred_region
          %396 = dma.done [#allocation4], 16384
        $region72: #{lica_critic_forward.1} parent=67 // pred_fallthru
          _
        %s397 = smul.u32 5, %s26
        %p398 = scmp.lt.s32.totalorder %s397, 9
        %s399 = scalar_select %p398, %s397, 9
        %s400 = smul.addr %s399, 8
        %s401 = scalar_lea.vmem %s0, %s400
        %p402 = pneg %p47
        %p403 = pneg %p44
        %s404 = smul.u32 5, %s26
        %p405 = scmp.lt.s32.totalorder %s404, 9
        %s406 = scalar_select %p405, %s404, 9
        %s407 = smul.addr %s406, 8
        %s408 = scalar_lea.vmem %s1, %s407
        %p409 = pneg %p73
        %p410 = pneg %p70
        %p411 = pneg %p94
        %p412 = pneg %p91
        %p413 = pneg %p115
        %p414 = pneg %p112
        %p415 = pneg %p136
        %p416 = pneg %p133
        %p417 = pneg %p157
        %p418 = pneg %p154
        %p419 = pneg %p178
        %p420 = pneg %p175
        %p421 = pneg %p199
        %p422 = pneg %p196
        %p423 = pneg %p220
        %p424 = pneg %p217
        %p425 = pneg %p241
        %p426 = pneg %p238
        %p427 = pneg %p262
        %p428 = pneg %p259
        %p429 = pneg %p283
        %p430 = pneg %p280
        %p431 = pneg %p309
        %p432 = pneg %p306
        %s433 = smul.u32 5, %s26
        %p434 = scmp.lt.s32.totalorder %s433, 9
        %s435 = scalar_select %p434, %s433, 9
        %s436 = smul.addr %s435, 8
        %s437 = scalar_lea.vmem %s12, %s436
        %s438 = smul.u32 5, %s26
        %p439 = scmp.lt.s32.totalorder %s438, 9
        %s440 = scalar_select %p439, %s438, 9
        %s441 = smul.addr %s440, 8
        %s442 = scalar_lea.vmem %s0, %s441
        %s443 = smul.u32 5, %s26
        %s444 = smul.u32 5, %s26
        %p445 = scmp.lt.s32.totalorder %s444, 9
        %s446 = scalar_select %p445, %s444, 9
        %s447 = smul.addr %s446, 8
        %s448 = scalar_lea.vmem %s1, %s447
        %s449 = smul.u32 5, %s26
        %s450 = smul.u32 5, %s26
        %p451 = scmp.lt.s32.totalorder %s450, 9
        %s452 = scalar_select %p451, %s450, 9
        %s453 = smul.addr %s452, 8
        %s454 = scalar_lea.vmem %s12, %s453
        %s455 = smul.u32 5, %s26
        %v457 = vld [vmem:[%s448] sm:$0xff]
        %v458 = vld [vmem:[%s448 + $0x8] sm:$0xff]
        %v459 = vld [vmem:[%s448 + $0x10] sm:$0xff]
        %v460 = vld [vmem:[%s448 + $0x18] sm:$0xff]
        %v461 = vld [vmem:[%s448 + $0x20] sm:$0xff]
        %v462 = vpack.c.bf16 %v458, %v457
        %v463 = vpack.c.bf16 %v460, %v459
        %v464 = vpack.c.bf16 %v461, %v461
        %v465 = vld [vmem:[%s2] sm:$0xff]
        %v466 = vld [vmem:[%s2 + $0x8] sm:$0xff]
        %v467 = vld [vmem:[%s2 + $0x10] sm:$0xff]
        %v468 = vld [vmem:[%s2 + $0x18] sm:$0xf]
        %v469 = vld [vmem:[%s2 + $0x1c] sm:$0xff]
        %v470 = vld [vmem:[%s2 + $0x24] sm:$0xff]
        %v471 = vld [vmem:[%s2 + $0x2c] sm:$0xff]
        %v472 = vld [vmem:[%s2 + $0x34] sm:$0xf]
        %v473 = vld [vmem:[%s2 + $0x38] sm:$0xff]
        %v474 = vld [vmem:[%s2 + $0x40] sm:$0xff]
        %v475 = vld [vmem:[%s2 + $0x48] sm:$0xff]
        %v476 = vld [vmem:[%s2 + $0x50] sm:$0xf]
        %v477 = vld [vmem:[%s2 + $0x54] sm:$0xff]
        %v478 = vld [vmem:[%s2 + $0x5c] sm:$0xff]
        %v479 = vld [vmem:[%s2 + $0x64] sm:$0xff]
        %v480 = vld [vmem:[%s2 + $0x6c] sm:$0xf]
        %v481 = vld [vmem:[%s2 + $0x70] sm:$0xff]
        %v482 = vld [vmem:[%s2 + $0x78] sm:$0xff]
        %v483 = vld [vmem:[%s2 + $0x80] sm:$0xff]
        %v484 = vld [vmem:[%s2 + $0x88] sm:$0xf]
        %v485 = vld [vmem:[%s2 + $0x8c] sm:$0xff]
        %v486 = vld [vmem:[%s2 + $0x94] sm:$0xff]
        %v487 = vld [vmem:[%s2 + $0x9c] sm:$0xff]
        %v488 = vld [vmem:[%s2 + $0xa4] sm:$0xf]
        %v489 = vld [vmem:[%s2 + $0xa8] sm:$0xff]
        %v490 = vld [vmem:[%s2 + $0xb0] sm:$0xff]
        %v491 = vld [vmem:[%s2 + $0xb8] sm:$0xff]
        %v492 = vld [vmem:[%s2 + $0xc0] sm:$0xf]
        %v493 = vld [vmem:[%s2 + $0xc4] sm:$0xff]
        %v494 = vld [vmem:[%s2 + $0xcc] sm:$0xff]
        %v495 = vld [vmem:[%s2 + $0xd4] sm:$0xff]
        %v496 = vld [vmem:[%s2 + $0xdc] sm:$0xf]
        %v497 = vld [vmem:[%s3] sm:$0xff]
        %v499 = vlaneseq
        %v500 = vshrl.u32 %v499, 7
        %v501 = vsub.s32 0, %v500
        %v502 = vrot.slane %v497, %v501
        %v503 = vlaneseq
        %v504 = vshrl.u32 %v503, 7
        %v505 = vsub.s32 1, %v504
        %v506 = vrot.slane %v497, %v505
        %v507 = vlaneseq
        %v508 = vshrl.u32 %v507, 7
        %v509 = vsub.s32 2, %v508
        %v510 = vrot.slane %v497, %v509
        %v511 = vlaneseq
        %v512 = vshrl.u32 %v511, 7
        %v513 = vsub.s32 3, %v512
        %v514 = vrot.slane %v497, %v513
        %v515 = vlaneseq
        %v516 = vshrl.u32 %v515, 7
        %v517 = vsub.s32 4, %v516
        %v518 = vrot.slane %v497, %v517
        %v519 = vlaneseq
        %v520 = vshrl.u32 %v519, 7
        %v521 = vsub.s32 5, %v520
        %v522 = vrot.slane %v497, %v521
        %v523 = vlaneseq
        %v524 = vshrl.u32 %v523, 7
        %v525 = vsub.s32 6, %v524
        %v526 = vrot.slane %v497, %v525
        %v566 = vunpack.c.l.b16 %v465
        %v567 = vunpack.c.h.b16 %v465
        %v568 = vunpack.c.l.b16 %v466
        %v569 = vunpack.c.h.b16 %v466
        %v570 = vunpack.c.l.b16 %v467
        %v571 = vunpack.c.h.b16 %v467
        %v572 = vunpack.c.l.b16 %v468
        %v573 = vunpack.c.l.b16 %v469
        %v574 = vunpack.c.h.b16 %v469
        %v575 = vunpack.c.l.b16 %v470
        %v576 = vunpack.c.h.b16 %v470
        %v577 = vunpack.c.l.b16 %v471
        %v578 = vunpack.c.h.b16 %v471
        %v579 = vunpack.c.l.b16 %v472
        %v580 = vunpack.c.l.b16 %v473
        %v581 = vunpack.c.h.b16 %v473
        %v582 = vunpack.c.l.b16 %v474
        %v583 = vunpack.c.h.b16 %v474
        %v584 = vunpack.c.l.b16 %v475
        %v585 = vunpack.c.h.b16 %v475
        %v586 = vunpack.c.l.b16 %v476
        %v587 = vunpack.c.l.b16 %v477
        %v588 = vunpack.c.h.b16 %v477
        %v589 = vunpack.c.l.b16 %v478
        %v590 = vunpack.c.h.b16 %v478
        %v591 = vunpack.c.l.b16 %v479
        %v592 = vunpack.c.h.b16 %v479
        %v593 = vunpack.c.l.b16 %v480
        %v594 = vunpack.c.l.b16 %v481
        %v595 = vunpack.c.h.b16 %v481
        %v596 = vunpack.c.l.b16 %v482
        %v597 = vunpack.c.h.b16 %v482
        %v598 = vunpack.c.l.b16 %v483
        %v599 = vunpack.c.h.b16 %v483
        %v600 = vunpack.c.l.b16 %v484
        %v601 = vunpack.c.l.b16 %v485
        %v602 = vunpack.c.h.b16 %v485
        %v603 = vunpack.c.l.b16 %v486
        %v604 = vunpack.c.h.b16 %v486
        %v605 = vunpack.c.l.b16 %v487
        %v606 = vunpack.c.h.b16 %v487
        %v607 = vunpack.c.l.b16 %v488
        %v608 = vunpack.c.l.b16 %v489
        %v609 = vunpack.c.h.b16 %v489
        %v610 = vunpack.c.l.b16 %v490
        %v611 = vunpack.c.h.b16 %v490
        %v612 = vunpack.c.l.b16 %v491
        %v613 = vunpack.c.h.b16 %v491
        %v614 = vunpack.c.l.b16 %v492
        %v615 = vunpack.c.l.b16 %v493
        %v616 = vunpack.c.h.b16 %v493
        %v617 = vunpack.c.l.b16 %v494
        %v618 = vunpack.c.h.b16 %v494
        %v619 = vunpack.c.l.b16 %v495
        %v620 = vunpack.c.h.b16 %v495
        %v621 = vunpack.c.l.b16 %v496
        %v622 = vpack.c.b16 %v573, %v566
        %v623 = vpack.c.b16 %v574, %v567
        %v624 = vpack.c.b16 %v575, %v568
        %v625 = vpack.c.b16 %v576, %v569
        %v626 = vpack.c.b16 %v577, %v570
        %v627 = vpack.c.b16 %v578, %v571
        %v628 = vpack.c.b16 %v579, %v572
        %v629 = vpack.c.b16 %v587, %v580
        %v630 = vpack.c.b16 %v588, %v581
        %v631 = vpack.c.b16 %v589, %v582
        %v632 = vpack.c.b16 %v590, %v583
        %v633 = vpack.c.b16 %v591, %v584
        %v634 = vpack.c.b16 %v592, %v585
        %v635 = vpack.c.b16 %v593, %v586
        %v636 = vpack.c.b16 %v601, %v594
        %v637 = vpack.c.b16 %v602, %v595
        %v638 = vpack.c.b16 %v603, %v596
        %v639 = vpack.c.b16 %v604, %v597
        %v640 = vpack.c.b16 %v605, %v598
        %v641 = vpack.c.b16 %v606, %v599
        %v642 = vpack.c.b16 %v607, %v600
        %v643 = vpack.c.b16 %v615, %v608
        %v644 = vpack.c.b16 %v616, %v609
        %v645 = vpack.c.b16 %v617, %v610
        %v646 = vpack.c.b16 %v618, %v611
        %v647 = vpack.c.b16 %v619, %v612
        %v648 = vpack.c.b16 %v620, %v613
        %v649 = vpack.c.b16 %v621, %v614
        %vm678 = vcmask 523264
        %v680 = vsel %vm678, %v462, 0
        %v683 = vsel %vm678, %v463, 0
        %v686 = vsel %vm678, %v464, 0
        %688 = vmatprep.subr.bf16.mxu0 0
        %689 = vmatpush1.bf16.msra.mxu0 0
        %690 = vmatprep.subr.bf16.mxu0 0
        %691 = vmatpush1.bf16.msra.mxu0 0
        %692 = vmatprep.subr.bf16.mxu0 0
        %693 = vmatpush1.bf16.msra.mxu0 0
        %694 = vmatprep.subr.bf16.mxu0 0
        %695 = vmatpush1.bf16.msra.mxu0 0
        %696 = vmatprep.subr.bf16.mxu0 %v644
        %697 = vmatpush1.bf16.msra.mxu0 %v643
        %698 = vmatprep.subr.bf16.mxu0 %v637
        %699 = vmatpush1.bf16.msra.mxu0 %v636
        %700 = vmatprep.subr.bf16.mxu0 %v630
        %701 = vmatpush1.bf16.msra.mxu0 %v629
        %702 = vmatprep.subr.bf16.mxu0 %v623
        %703 = vmatpush1.bf16.msra.mxu0 %v622
        %704 = vmatprep.subr.bf16.mxu0 0
        %705 = vmatpush2.bf16.msra.mxu0 0
        %706 = vmatprep.subr.bf16.mxu0 0
        %707 = vmatpush2.bf16.msra.mxu0 0
        %708 = vmatprep.subr.bf16.mxu0 0
        %709 = vmatpush2.bf16.msra.mxu0 0
        %710 = vmatprep.subr.bf16.mxu0 0
        %711 = vmatpush2.bf16.msra.mxu0 0
        %712 = vmatprep.subr.bf16.mxu0 0
        %713 = vmatpush2.bf16.msra.mxu0 0
        %714 = vmatprep.subr.bf16.mxu0 0
        %715 = vmatpush2.bf16.msra.mxu0 0
        %716 = vmatprep.subr.bf16.mxu0 0
        %717 = vmatpush2.bf16.msra.mxu0 0
        %718 = vmatprep.subr.bf16.mxu0 0
        %719 = vmatpush2.bf16.msra.mxu0 0
        %720 = vmatprep.mubr.bf16.mxu0 0
        %721 = vmatmul.mubr.bf16.gmra.mxu0 %v680
        %v722 = vpop.f32.mrf.mxu0
        %v723 = vadd.f32 %v502, %v722
        %v724 = vpop.f32.mrf.mxu0
        %v725 = vadd.f32 %v506, %v724
        %v726 = vpop.f32.mrf.mxu0
        %v727 = vadd.f32 %v502, %v726
        %v728 = vpop.f32.mrf.mxu0
        %v729 = vadd.f32 %v506, %v728
        %730 = vmatprep.mubr.bf16.mxu0 0
        %731 = vmatmul.mubr.bf16.gmra.mxu0 %v683
        %v732 = vpop.f32.mrf.mxu0
        %v733 = vadd.f32 %v502, %v732
        %v734 = vpop.f32.mrf.mxu0
        %v735 = vadd.f32 %v506, %v734
        %v736 = vpop.f32.mrf.mxu0
        %v737 = vadd.f32 %v502, %v736
        %v738 = vpop.f32.mrf.mxu0
        %v739 = vadd.f32 %v506, %v738
        %740 = vmatprep.mubr.bf16.mxu0 0
        %741 = vmatmul.mubr.bf16.gmra.mxu0 %v686
        %v742 = vpop.f32.mrf.mxu0
        %v743 = vadd.f32 %v502, %v742
        %v744 = vpop.f32.mrf.mxu0
        %v745 = vadd.f32 %v506, %v744
        %v746 = vpop.f32.mrf.mxu0
        %v747 = vpop.f32.mrf.mxu0
        %748 = vdwg.mxu0
        %749 = vmatprep.subr.bf16.mxu0 0
        %750 = vmatpush1.bf16.msra.mxu0 0
        %751 = vmatprep.subr.bf16.mxu0 0
        %752 = vmatpush1.bf16.msra.mxu0 0
        %753 = vmatprep.subr.bf16.mxu0 0
        %754 = vmatpush1.bf16.msra.mxu0 0
        %755 = vmatprep.subr.bf16.mxu0 0
        %756 = vmatpush1.bf16.msra.mxu0 0
        %757 = vmatprep.subr.bf16.mxu0 %v646
        %758 = vmatpush1.bf16.msra.mxu0 %v645
        %759 = vmatprep.subr.bf16.mxu0 %v639
        %760 = vmatpush1.bf16.msra.mxu0 %v638
        %761 = vmatprep.subr.bf16.mxu0 %v632
        %762 = vmatpush1.bf16.msra.mxu0 %v631
        %763 = vmatprep.subr.bf16.mxu0 %v625
        %764 = vmatpush1.bf16.msra.mxu0 %v624
        %765 = vmatprep.subr.bf16.mxu0 0
        %766 = vmatpush2.bf16.msra.mxu0 0
        %767 = vmatprep.subr.bf16.mxu0 0
        %768 = vmatpush2.bf16.msra.mxu0 0
        %769 = vmatprep.subr.bf16.mxu0 0
        %770 = vmatpush2.bf16.msra.mxu0 0
        %771 = vmatprep.subr.bf16.mxu0 0
        %772 = vmatpush2.bf16.msra.mxu0 0
        %773 = vmatprep.subr.bf16.mxu0 0
        %774 = vmatpush2.bf16.msra.mxu0 0
        %775 = vmatprep.subr.bf16.mxu0 0
        %776 = vmatpush2.bf16.msra.mxu0 0
        %777 = vmatprep.subr.bf16.mxu0 0
        %778 = vmatpush2.bf16.msra.mxu0 0
        %779 = vmatprep.subr.bf16.mxu0 0
        %780 = vmatpush2.bf16.msra.mxu0 0
        %781 = vmatprep.mubr.bf16.mxu0 0
        %782 = vmatmul.mubr.bf16.gmra.mxu0 %v680
        %v783 = vpop.f32.mrf.mxu0
        %v784 = vadd.f32 %v510, %v783
        %v785 = vpop.f32.mrf.mxu0
        %v786 = vadd.f32 %v514, %v785
        %v787 = vpop.f32.mrf.mxu0
        %v788 = vadd.f32 %v510, %v787
        %v789 = vpop.f32.mrf.mxu0
        %v790 = vadd.f32 %v514, %v789
        %791 = vmatprep.mubr.bf16.mxu0 0
        %792 = vmatmul.mubr.bf16.gmra.mxu0 %v683
        %v793 = vpop.f32.mrf.mxu0
        %v794 = vadd.f32 %v510, %v793
        %v795 = vpop.f32.mrf.mxu0
        %v796 = vadd.f32 %v514, %v795
        %v797 = vpop.f32.mrf.mxu0
        %v798 = vadd.f32 %v510, %v797
        %v799 = vpop.f32.mrf.mxu0
        %v800 = vadd.f32 %v514, %v799
        %801 = vmatprep.mubr.bf16.mxu0 0
        %802 = vmatmul.mubr.bf16.gmra.mxu0 %v686
        %v803 = vpop.f32.mrf.mxu0
        %v804 = vadd.f32 %v510, %v803
        %v805 = vpop.f32.mrf.mxu0
        %v806 = vadd.f32 %v514, %v805
        %v807 = vpop.f32.mrf.mxu0
        %v808 = vpop.f32.mrf.mxu0
        %809 = vdwg.mxu0
        %810 = vmatprep.subr.bf16.mxu0 0
        %811 = vmatpush1.bf16.msra.mxu0 0
        %812 = vmatprep.subr.bf16.mxu0 0
        %813 = vmatpush1.bf16.msra.mxu0 0
        %814 = vmatprep.subr.bf16.mxu0 0
        %815 = vmatpush1.bf16.msra.mxu0 0
        %816 = vmatprep.subr.bf16.mxu0 0
        %817 = vmatpush1.bf16.msra.mxu0 0
        %818 = vmatprep.subr.bf16.mxu0 %v648
        %819 = vmatpush1.bf16.msra.mxu0 %v647
        %820 = vmatprep.subr.bf16.mxu0 %v641
        %821 = vmatpush1.bf16.msra.mxu0 %v640
        %822 = vmatprep.subr.bf16.mxu0 %v634
        %823 = vmatpush1.bf16.msra.mxu0 %v633
        %824 = vmatprep.subr.bf16.mxu0 %v627
        %825 = vmatpush1.bf16.msra.mxu0 %v626
        %826 = vmatprep.subr.bf16.mxu0 0
        %827 = vmatpush2.bf16.msra.mxu0 0
        %828 = vmatprep.subr.bf16.mxu0 0
        %829 = vmatpush2.bf16.msra.mxu0 0
        %830 = vmatprep.subr.bf16.mxu0 0
        %831 = vmatpush2.bf16.msra.mxu0 0
        %832 = vmatprep.subr.bf16.mxu0 0
        %833 = vmatpush2.bf16.msra.mxu0 0
        %834 = vmatprep.subr.bf16.mxu0 0
        %835 = vmatpush2.bf16.msra.mxu0 0
        %836 = vmatprep.subr.bf16.mxu0 0
        %837 = vmatpush2.bf16.msra.mxu0 0
        %838 = vmatprep.subr.bf16.mxu0 0
        %839 = vmatpush2.bf16.msra.mxu0 0
        %840 = vmatprep.subr.bf16.mxu0 0
        %841 = vmatpush2.bf16.msra.mxu0 0
        %842 = vmatprep.mubr.bf16.mxu0 0
        %843 = vmatmul.mubr.bf16.gmra.mxu0 %v680
        %v844 = vpop.f32.mrf.mxu0
        %v845 = vadd.f32 %v518, %v844
        %v846 = vpop.f32.mrf.mxu0
        %v847 = vadd.f32 %v522, %v846
        %v848 = vpop.f32.mrf.mxu0
        %v849 = vadd.f32 %v518, %v848
        %v850 = vpop.f32.mrf.mxu0
        %v851 = vadd.f32 %v522, %v850
        %852 = vmatprep.mubr.bf16.mxu0 0
        %853 = vmatmul.mubr.bf16.gmra.mxu0 %v683
        %v854 = vpop.f32.mrf.mxu0
        %v855 = vadd.f32 %v518, %v854
        %v856 = vpop.f32.mrf.mxu0
        %v857 = vadd.f32 %v522, %v856
        %v858 = vpop.f32.mrf.mxu0
        %v859 = vadd.f32 %v518, %v858
        %v860 = vpop.f32.mrf.mxu0
        %v861 = vadd.f32 %v522, %v860
        %862 = vmatprep.mubr.bf16.mxu0 0
        %863 = vmatmul.mubr.bf16.gmra.mxu0 %v686
        %v864 = vpop.f32.mrf.mxu0
        %v865 = vadd.f32 %v518, %v864
        %v866 = vpop.f32.mrf.mxu0
        %v867 = vadd.f32 %v522, %v866
        %v868 = vpop.f32.mrf.mxu0
        %v869 = vpop.f32.mrf.mxu0
        %870 = vdwg.mxu0
        %871 = vmatprep.subr.bf16.mxu0 0
        %872 = vmatpush1.bf16.msra.mxu0 0
        %873 = vmatprep.subr.bf16.mxu0 0
        %874 = vmatpush1.bf16.msra.mxu0 0
        %875 = vmatprep.subr.bf16.mxu0 0
        %876 = vmatpush1.bf16.msra.mxu0 0
        %877 = vmatprep.subr.bf16.mxu0 0
        %878 = vmatpush1.bf16.msra.mxu0 0
        %879 = vmatprep.subr.bf16.mxu0 0
        %880 = vmatpush1.bf16.msra.mxu0 %v649
        %881 = vmatprep.subr.bf16.mxu0 0
        %882 = vmatpush1.bf16.msra.mxu0 %v642
        %883 = vmatprep.subr.bf16.mxu0 0
        %884 = vmatpush1.bf16.msra.mxu0 %v635
        %885 = vmatprep.subr.bf16.mxu0 0
        %886 = vmatpush1.bf16.msra.mxu0 %v628
        %887 = vmatprep.subr.bf16.mxu0 0
        %888 = vmatpush2.bf16.msra.mxu0 0
        %889 = vmatprep.subr.bf16.mxu0 0
        %890 = vmatpush2.bf16.msra.mxu0 0
        %891 = vmatprep.subr.bf16.mxu0 0
        %892 = vmatpush2.bf16.msra.mxu0 0
        %893 = vmatprep.subr.bf16.mxu0 0
        %894 = vmatpush2.bf16.msra.mxu0 0
        %895 = vmatprep.subr.bf16.mxu0 0
        %896 = vmatpush2.bf16.msra.mxu0 0
        %897 = vmatprep.subr.bf16.mxu0 0
        %898 = vmatpush2.bf16.msra.mxu0 0
        %899 = vmatprep.subr.bf16.mxu0 0
        %900 = vmatpush2.bf16.msra.mxu0 0
        %901 = vmatprep.subr.bf16.mxu0 0
        %902 = vmatpush2.bf16.msra.mxu0 0
        %903 = vmatprep.mubr.bf16.mxu0 0
        %904 = vmatmul.mubr.bf16.gmra.mxu0 %v680
        %v905 = vpop.f32.mrf.mxu0
        %v906 = vadd.f32 %v526, %v905
        %v907 = vpop.f32.mrf.mxu0
        %v908 = vpop.f32.mrf.mxu0
        %v909 = vadd.f32 %v526, %v908
        %v910 = vpop.f32.mrf.mxu0
        %911 = vmatprep.mubr.bf16.mxu0 0
        %912 = vmatmul.mubr.bf16.gmra.mxu0 %v683
        %v913 = vpop.f32.mrf.mxu0
        %v914 = vadd.f32 %v526, %v913
        %v915 = vpop.f32.mrf.mxu0
        %v916 = vpop.f32.mrf.mxu0
        %v917 = vadd.f32 %v526, %v916
        %v918 = vpop.f32.mrf.mxu0
        %919 = vmatprep.mubr.bf16.mxu0 0
        %920 = vmatmul.mubr.bf16.gmra.mxu0 %v686
        %v921 = vpop.f32.mrf.mxu0
        %v922 = vadd.f32 %v526, %v921
        %v923 = vpop.f32.mrf.mxu0
        %v924 = vpop.f32.mrf.mxu0
        %v925 = vpop.f32.mrf.mxu0
        %926 = vdwg.mxu0
        %v927 = vmax.f32 %v723, 0.0
        %v928 = vmax.f32 %v725, 0.0
        %v929 = vmax.f32 %v784, 0.0
        %v930 = vmax.f32 %v786, 0.0
        %v931 = vmax.f32 %v727, 0.0
        %v932 = vmax.f32 %v729, 0.0
        %v933 = vmax.f32 %v788, 0.0
        %v934 = vmax.f32 %v790, 0.0
        %v935 = vmax.f32 %v733, 0.0
        %v936 = vmax.f32 %v735, 0.0
        %v937 = vmax.f32 %v794, 0.0
        %v938 = vmax.f32 %v796, 0.0
        %v939 = vmax.f32 %v737, 0.0
        %v940 = vmax.f32 %v739, 0.0
        %v941 = vmax.f32 %v798, 0.0
        %v942 = vmax.f32 %v800, 0.0
        %v943 = vmax.f32 %v743, 0.0
        %v944 = vmax.f32 %v745, 0.0
        %v945 = vmax.f32 %v804, 0.0
        %v946 = vmax.f32 %v806, 0.0
        %v947 = vmax.f32 %v845, 0.0
        %v948 = vmax.f32 %v849, 0.0
        %v949 = vmax.f32 %v855, 0.0
        %v950 = vmax.f32 %v859, 0.0
        %v951 = vmax.f32 %v865, 0.0
        %v952 = vmax.f32 %v906, 0.0
        %v953 = vmax.f32 %v909, 0.0
        %v954 = vmax.f32 %v914, 0.0
        %v955 = vmax.f32 %v917, 0.0
        %v956 = vmax.f32 %v922, 0.0
        %v957 = vpack.c.bf16 %v931, %v927
        %v958 = vpack.c.bf16 %v932, %v928
        %v959 = vpack.c.bf16 %v933, %v929
        %v960 = vpack.c.bf16 %v934, %v930
        %v961 = vpack.c.bf16 %v939, %v935
        %v962 = vpack.c.bf16 %v940, %v936
        %v963 = vpack.c.bf16 %v941, %v937
        %v964 = vpack.c.bf16 %v942, %v938
        %v965 = vpack.c.bf16 %v943, %v943
        %v966 = vpack.c.bf16 %v944, %v944
        %v967 = vpack.c.bf16 %v945, %v945
        %v968 = vpack.c.bf16 %v946, %v946
        %v969 = vld [vmem:[#allocation3] sm:$0xff]
        %v970 = vld [vmem:[#allocation3 + $0x8] sm:$0xff]
        %v971 = vld [vmem:[#allocation3 + $0x10] sm:$0xff]
        %v972 = vld [vmem:[#allocation3 + $0x18] sm:$0xff]
        %v973 = vld [vmem:[#allocation3 + $0x20] sm:$0xff]
        %v974 = vld [vmem:[#allocation3 + $0x28] sm:$0xff]
        %v975 = vld [vmem:[#allocation3 + $0x30] sm:$0xff]
        %v976 = vld [vmem:[#allocation3 + $0x38] sm:$0xff]
        %v977 = vld [vmem:[#allocation3 + $0x40] sm:$0xff]
        %v978 = vld [vmem:[#allocation3 + $0x48] sm:$0xff]
        %v979 = vld [vmem:[#allocation3 + $0x50] sm:$0xff]
        %v980 = vld [vmem:[#allocation3 + $0x58] sm:$0xff]
        %v981 = vld [vmem:[#allocation3 + $0x60] sm:$0xff]
        %v982 = vld [vmem:[#allocation3 + $0x68] sm:$0xff]
        %v983 = vld [vmem:[#allocation3 + $0x70] sm:$0xff]
        %v984 = vld [vmem:[#allocation3 + $0x78] sm:$0xff]
        %v985 = vld [vmem:[#allocation3 + $0x80] sm:$0xff]
        %v986 = vld [vmem:[#allocation3 + $0x88] sm:$0xff]
        %v987 = vld [vmem:[#allocation3 + $0x90] sm:$0xff]
        %v988 = vld [vmem:[#allocation3 + $0x98] sm:$0xff]
        %v989 = vld [vmem:[#allocation3 + $0xa0] sm:$0xff]
        %v990 = vld [vmem:[#allocation3 + $0xa8] sm:$0xff]
        %v991 = vld [vmem:[#allocation3 + $0xb0] sm:$0xff]
        %v992 = vld [vmem:[#allocation3 + $0xb8] sm:$0xff]
        %v993 = vld [vmem:[#allocation3 + $0xc0] sm:$0xff]
        %v994 = vld [vmem:[#allocation3 + $0xc8] sm:$0xff]
        %v995 = vld [vmem:[#allocation3 + $0xd0] sm:$0xff]
        %v996 = vld [vmem:[#allocation3 + $0xd8] sm:$0xff]
        %v997 = vld [vmem:[#allocation3 + $0xe0] sm:$0xff]
        %v998 = vld [vmem:[#allocation3 + $0xe8] sm:$0xff]
        %v999 = vld [vmem:[#allocation3 + $0xf0] sm:$0xff]
        %v1000 = vld [vmem:[#allocation3 + $0xf8] sm:$0xff]
        %v1001 = vld [vmem:[#allocation3 + $0x100] sm:$0xff]
        %v1002 = vld [vmem:[#allocation3 + $0x108] sm:$0xff]
        %v1003 = vld [vmem:[#allocation3 + $0x110] sm:$0xff]
        %v1004 = vld [vmem:[#allocation3 + $0x118] sm:$0xff]
        %v1005 = vld [vmem:[#allocation3 + $0x120] sm:$0xff]
        %v1006 = vld [vmem:[#allocation3 + $0x128] sm:$0xff]
        %v1007 = vld [vmem:[#allocation3 + $0x130] sm:$0xff]
        %v1008 = vld [vmem:[#allocation3 + $0x138] sm:$0xff]
        %v1009 = vld [vmem:[#allocation3 + $0x140] sm:$0xff]
        %v1010 = vld [vmem:[#allocation3 + $0x148] sm:$0xff]
        %v1011 = vld [vmem:[#allocation3 + $0x150] sm:$0xff]
        %v1012 = vld [vmem:[#allocation3 + $0x158] sm:$0xff]
        %v1013 = vld [vmem:[#allocation3 + $0x160] sm:$0xff]
        %v1014 = vld [vmem:[#allocation3 + $0x168] sm:$0xff]
        %v1015 = vld [vmem:[#allocation3 + $0x170] sm:$0xff]
        %v1016 = vld [vmem:[#allocation3 + $0x178] sm:$0xff]
        %v1017 = vld [vmem:[#allocation3 + $0x180] sm:$0xff]
        %v1018 = vld [vmem:[#allocation3 + $0x188] sm:$0xff]
        %v1019 = vld [vmem:[#allocation3 + $0x190] sm:$0xff]
        %v1020 = vld [vmem:[#allocation3 + $0x198] sm:$0xff]
        %v1021 = vld [vmem:[#allocation3 + $0x1a0] sm:$0xff]
        %v1022 = vld [vmem:[#allocation3 + $0x1a8] sm:$0xff]
        %v1023 = vld [vmem:[#allocation3 + $0x1b0] sm:$0xff]
        %v1024 = vld [vmem:[#allocation3 + $0x1b8] sm:$0xff]
        %v1025 = vld [vmem:[#allocation3 + $0x1c0] sm:$0xff]
        %v1026 = vld [vmem:[#allocation3 + $0x1c8] sm:$0xff]
        %v1027 = vld [vmem:[#allocation3 + $0x1d0] sm:$0xff]
        %v1028 = vld [vmem:[#allocation3 + $0x1d8] sm:$0xff]
        %v1029 = vld [vmem:[#allocation3 + $0x1e0] sm:$0xff]
        %v1030 = vld [vmem:[#allocation3 + $0x1e8] sm:$0xff]
        %v1031 = vld [vmem:[#allocation3 + $0x1f0] sm:$0xff]
        %v1032 = vld [vmem:[#allocation3 + $0x1f8] sm:$0xff]
        %v1033 = vld [vmem:[#allocation3 + $0x200] sm:$0xff]
        %v1034 = vld [vmem:[#allocation3 + $0x208] sm:$0xff]
        %v1035 = vld [vmem:[#allocation3 + $0x210] sm:$0xff]
        %v1036 = vld [vmem:[#allocation3 + $0x218] sm:$0xff]
        %v1037 = vld [vmem:[#allocation3 + $0x220] sm:$0xff]
        %v1038 = vld [vmem:[#allocation3 + $0x228] sm:$0xff]
        %v1039 = vld [vmem:[#allocation3 + $0x230] sm:$0xff]
        %v1040 = vld [vmem:[#allocation3 + $0x238] sm:$0xff]
        %v1041 = vld [vmem:[#allocation3 + $0x240] sm:$0xff]
        %v1042 = vld [vmem:[#allocation3 + $0x248] sm:$0xff]
        %v1043 = vld [vmem:[#allocation3 + $0x250] sm:$0xff]
        %v1044 = vld [vmem:[#allocation3 + $0x258] sm:$0xff]
        %v1045 = vld [vmem:[#allocation3 + $0x260] sm:$0xff]
        %v1046 = vld [vmem:[#allocation3 + $0x268] sm:$0xff]
        %v1047 = vld [vmem:[#allocation3 + $0x270] sm:$0xff]
        %v1048 = vld [vmem:[#allocation3 + $0x278] sm:$0xff]
        %v1049 = vld [vmem:[#allocation3 + $0x280] sm:$0xff]
        %v1050 = vld [vmem:[#allocation3 + $0x288] sm:$0xff]
        %v1051 = vld [vmem:[#allocation3 + $0x290] sm:$0xff]
        %v1052 = vld [vmem:[#allocation3 + $0x298] sm:$0xff]
        %v1053 = vld [vmem:[#allocation3 + $0x2a0] sm:$0xff]
        %v1054 = vld [vmem:[#allocation3 + $0x2a8] sm:$0xff]
        %v1055 = vld [vmem:[#allocation3 + $0x2b0] sm:$0xff]
        %v1056 = vld [vmem:[#allocation3 + $0x2b8] sm:$0xff]
        %v1057 = vld [vmem:[#allocation3 + $0x2c0] sm:$0xff]
        %v1058 = vld [vmem:[#allocation3 + $0x2c8] sm:$0xff]
        %v1059 = vld [vmem:[#allocation3 + $0x2d0] sm:$0xff]
        %v1060 = vld [vmem:[#allocation3 + $0x2d8] sm:$0xff]
        %v1061 = vld [vmem:[#allocation3 + $0x2e0] sm:$0xff]
        %v1062 = vld [vmem:[#allocation3 + $0x2e8] sm:$0xff]
        %v1063 = vld [vmem:[#allocation3 + $0x2f0] sm:$0xff]
        %v1064 = vld [vmem:[#allocation3 + $0x2f8] sm:$0xff]
        %v1065 = vld [vmem:[#allocation3 + $0x300] sm:$0xff]
        %v1066 = vld [vmem:[#allocation3 + $0x308] sm:$0xff]
        %v1067 = vld [vmem:[#allocation3 + $0x310] sm:$0xff]
        %v1068 = vld [vmem:[#allocation3 + $0x318] sm:$0xff]
        %v1069 = vld [vmem:[#allocation3 + $0x320] sm:$0xff]
        %v1070 = vld [vmem:[#allocation3 + $0x328] sm:$0xff]
        %v1071 = vld [vmem:[#allocation3 + $0x330] sm:$0xff]
        %v1072 = vld [vmem:[#allocation3 + $0x338] sm:$0xff]
        %v1073 = vld [vmem:[#allocation3 + $0x340] sm:$0xff]
        %v1074 = vld [vmem:[#allocation3 + $0x348] sm:$0xff]
        %v1075 = vld [vmem:[#allocation3 + $0x350] sm:$0xff]
        %v1076 = vld [vmem:[#allocation3 + $0x358] sm:$0xff]
        %v1077 = vld [vmem:[#allocation3 + $0x360] sm:$0xff]
        %v1078 = vld [vmem:[#allocation3 + $0x368] sm:$0xff]
        %v1079 = vld [vmem:[#allocation3 + $0x370] sm:$0xff]
        %v1080 = vld [vmem:[#allocation3 + $0x378] sm:$0xff]
        %v1081 = vld [vmem:[#allocation3 + $0x380] sm:$0xff]
        %v1082 = vld [vmem:[#allocation3 + $0x388] sm:$0xff]
        %v1083 = vld [vmem:[#allocation3 + $0x390] sm:$0xff]
        %v1084 = vld [vmem:[#allocation3 + $0x398] sm:$0xff]
        %v1085 = vld [vmem:[#allocation3 + $0x3a0] sm:$0xff]
        %v1086 = vld [vmem:[#allocation3 + $0x3a8] sm:$0xff]
        %v1087 = vld [vmem:[#allocation3 + $0x3b0] sm:$0xff]
        %v1088 = vld [vmem:[#allocation3 + $0x3b8] sm:$0xff]
        %v1089 = vld [vmem:[#allocation3 + $0x3c0] sm:$0xff]
        %v1090 = vld [vmem:[#allocation3 + $0x3c8] sm:$0xff]
        %v1091 = vld [vmem:[#allocation3 + $0x3d0] sm:$0xff]
        %v1092 = vld [vmem:[#allocation3 + $0x3d8] sm:$0xff]
        %v1093 = vld [vmem:[#allocation3 + $0x3e0] sm:$0xff]
        %v1094 = vld [vmem:[#allocation3 + $0x3e8] sm:$0xff]
        %v1095 = vld [vmem:[#allocation3 + $0x3f0] sm:$0xff]
        %v1096 = vld [vmem:[#allocation3 + $0x3f8] sm:$0xff]
        %v1097 = vld [vmem:[%s5] sm:$0xf]
        %v1099 = vlaneseq
        %v1100 = vshrl.u32 %v1099, 7
        %v1101 = vsub.s32 0, %v1100
        %v1102 = vrot.slane %v1097, %v1101
        %v1103 = vlaneseq
        %v1104 = vshrl.u32 %v1103, 7
        %v1105 = vsub.s32 1, %v1104
        %v1106 = vrot.slane %v1097, %v1105
        %v1107 = vlaneseq
        %v1108 = vshrl.u32 %v1107, 7
        %v1109 = vsub.s32 2, %v1108
        %v1110 = vrot.slane %v1097, %v1109
        %v1111 = vlaneseq
        %v1112 = vshrl.u32 %v1111, 7
        %v1113 = vsub.s32 3, %v1112
        %v1114 = vrot.slane %v1097, %v1113
        %v1247 = vunpack.c.l.b16 %v969
        %v1248 = vunpack.c.h.b16 %v969
        %v1249 = vunpack.c.l.b16 %v970
        %v1250 = vunpack.c.h.b16 %v970
        %v1251 = vunpack.c.l.b16 %v971
        %v1252 = vunpack.c.h.b16 %v971
        %v1253 = vunpack.c.l.b16 %v972
        %v1254 = vunpack.c.h.b16 %v972
        %v1255 = vunpack.c.l.b16 %v973
        %v1256 = vunpack.c.h.b16 %v973
        %v1257 = vunpack.c.l.b16 %v974
        %v1258 = vunpack.c.h.b16 %v974
        %v1259 = vunpack.c.l.b16 %v975
        %v1260 = vunpack.c.h.b16 %v975
        %v1261 = vunpack.c.l.b16 %v976
        %v1262 = vunpack.c.h.b16 %v976
        %v1263 = vunpack.c.l.b16 %v977
        %v1264 = vunpack.c.h.b16 %v977
        %v1265 = vunpack.c.l.b16 %v978
        %v1266 = vunpack.c.h.b16 %v978
        %v1267 = vunpack.c.l.b16 %v979
        %v1268 = vunpack.c.h.b16 %v979
        %v1269 = vunpack.c.l.b16 %v980
        %v1270 = vunpack.c.h.b16 %v980
        %v1271 = vunpack.c.l.b16 %v981
        %v1272 = vunpack.c.h.b16 %v981
        %v1273 = vunpack.c.l.b16 %v982
        %v1274 = vunpack.c.h.b16 %v982
        %v1275 = vunpack.c.l.b16 %v983
        %v1276 = vunpack.c.h.b16 %v983
        %v1277 = vunpack.c.l.b16 %v984
        %v1278 = vunpack.c.h.b16 %v984
        %v1279 = vunpack.c.l.b16 %v985
        %v1280 = vunpack.c.h.b16 %v985
        %v1281 = vunpack.c.l.b16 %v986
        %v1282 = vunpack.c.h.b16 %v986
        %v1283 = vunpack.c.l.b16 %v987
        %v1284 = vunpack.c.h.b16 %v987
        %v1285 = vunpack.c.l.b16 %v988
        %v1286 = vunpack.c.h.b16 %v988
        %v1287 = vunpack.c.l.b16 %v989
        %v1288 = vunpack.c.h.b16 %v989
        %v1289 = vunpack.c.l.b16 %v990
        %v1290 = vunpack.c.h.b16 %v990
        %v1291 = vunpack.c.l.b16 %v991
        %v1292 = vunpack.c.h.b16 %v991
        %v1293 = vunpack.c.l.b16 %v992
        %v1294 = vunpack.c.h.b16 %v992
        %v1295 = vunpack.c.l.b16 %v993
        %v1296 = vunpack.c.h.b16 %v993
        %v1297 = vunpack.c.l.b16 %v994
        %v1298 = vunpack.c.h.b16 %v994
        %v1299 = vunpack.c.l.b16 %v995
        %v1300 = vunpack.c.h.b16 %v995
        %v1301 = vunpack.c.l.b16 %v996
        %v1302 = vunpack.c.h.b16 %v996
        %v1303 = vunpack.c.l.b16 %v997
        %v1304 = vunpack.c.h.b16 %v997
        %v1305 = vunpack.c.l.b16 %v998
        %v1306 = vunpack.c.h.b16 %v998
        %v1307 = vunpack.c.l.b16 %v999
        %v1308 = vunpack.c.h.b16 %v999
        %v1309 = vunpack.c.l.b16 %v1000
        %v1310 = vunpack.c.h.b16 %v1000
        %v1311 = vunpack.c.l.b16 %v1001
        %v1312 = vunpack.c.h.b16 %v1001
        %v1313 = vunpack.c.l.b16 %v1002
        %v1314 = vunpack.c.h.b16 %v1002
        %v1315 = vunpack.c.l.b16 %v1003
        %v1316 = vunpack.c.h.b16 %v1003
        %v1317 = vunpack.c.l.b16 %v1004
        %v1318 = vunpack.c.h.b16 %v1004
        %v1319 = vunpack.c.l.b16 %v1005
        %v1320 = vunpack.c.h.b16 %v1005
        %v1321 = vunpack.c.l.b16 %v1006
        %v1322 = vunpack.c.h.b16 %v1006
        %v1323 = vunpack.c.l.b16 %v1007
        %v1324 = vunpack.c.h.b16 %v1007
        %v1325 = vunpack.c.l.b16 %v1008
        %v1326 = vunpack.c.h.b16 %v1008
        %v1327 = vunpack.c.l.b16 %v1009
        %v1328 = vunpack.c.h.b16 %v1009
        %v1329 = vunpack.c.l.b16 %v1010
        %v1330 = vunpack.c.h.b16 %v1010
        %v1331 = vunpack.c.l.b16 %v1011
        %v1332 = vunpack.c.h.b16 %v1011
        %v1333 = vunpack.c.l.b16 %v1012
        %v1334 = vunpack.c.h.b16 %v1012
        %v1335 = vunpack.c.l.b16 %v1013
        %v1336 = vunpack.c.h.b16 %v1013
        %v1337 = vunpack.c.l.b16 %v1014
        %v1338 = vunpack.c.h.b16 %v1014
        %v1339 = vunpack.c.l.b16 %v1015
        %v1340 = vunpack.c.h.b16 %v1015
        %v1341 = vunpack.c.l.b16 %v1016
        %v1342 = vunpack.c.h.b16 %v1016
        %v1343 = vunpack.c.l.b16 %v1017
        %v1344 = vunpack.c.h.b16 %v1017
        %v1345 = vunpack.c.l.b16 %v1018
        %v1346 = vunpack.c.h.b16 %v1018
        %v1347 = vunpack.c.l.b16 %v1019
        %v1348 = vunpack.c.h.b16 %v1019
        %v1349 = vunpack.c.l.b16 %v1020
        %v1350 = vunpack.c.h.b16 %v1020
        %v1351 = vunpack.c.l.b16 %v1021
        %v1352 = vunpack.c.h.b16 %v1021
        %v1353 = vunpack.c.l.b16 %v1022
        %v1354 = vunpack.c.h.b16 %v1022
        %v1355 = vunpack.c.l.b16 %v1023
        %v1356 = vunpack.c.h.b16 %v1023
        %v1357 = vunpack.c.l.b16 %v1024
        %v1358 = vunpack.c.h.b16 %v1024
        %v1359 = vunpack.c.l.b16 %v1025
        %v1360 = vunpack.c.h.b16 %v1025
        %v1361 = vunpack.c.l.b16 %v1026
        %v1362 = vunpack.c.h.b16 %v1026
        %v1363 = vunpack.c.l.b16 %v1027
        %v1364 = vunpack.c.h.b16 %v1027
        %v1365 = vunpack.c.l.b16 %v1028
        %v1366 = vunpack.c.h.b16 %v1028
        %v1367 = vunpack.c.l.b16 %v1029
        %v1368 = vunpack.c.h.b16 %v1029
        %v1369 = vunpack.c.l.b16 %v1030
        %v1370 = vunpack.c.h.b16 %v1030
        %v1371 = vunpack.c.l.b16 %v1031
        %v1372 = vunpack.c.h.b16 %v1031
        %v1373 = vunpack.c.l.b16 %v1032
        %v1374 = vunpack.c.h.b16 %v1032
        %v1375 = vunpack.c.l.b16 %v1033
        %v1376 = vunpack.c.h.b16 %v1033
        %v1377 = vunpack.c.l.b16 %v1034
        %v1378 = vunpack.c.h.b16 %v1034
        %v1379 = vunpack.c.l.b16 %v1035
        %v1380 = vunpack.c.h.b16 %v1035
        %v1381 = vunpack.c.l.b16 %v1036
        %v1382 = vunpack.c.h.b16 %v1036
        %v1383 = vunpack.c.l.b16 %v1037
        %v1384 = vunpack.c.h.b16 %v1037
        %v1385 = vunpack.c.l.b16 %v1038
        %v1386 = vunpack.c.h.b16 %v1038
        %v1387 = vunpack.c.l.b16 %v1039
        %v1388 = vunpack.c.h.b16 %v1039
        %v1389 = vunpack.c.l.b16 %v1040
        %v1390 = vunpack.c.h.b16 %v1040
        %v1391 = vunpack.c.l.b16 %v1041
        %v1392 = vunpack.c.h.b16 %v1041
        %v1393 = vunpack.c.l.b16 %v1042
        %v1394 = vunpack.c.h.b16 %v1042
        %v1395 = vunpack.c.l.b16 %v1043
        %v1396 = vunpack.c.h.b16 %v1043
        %v1397 = vunpack.c.l.b16 %v1044
        %v1398 = vunpack.c.h.b16 %v1044
        %v1399 = vunpack.c.l.b16 %v1045
        %v1400 = vunpack.c.h.b16 %v1045
        %v1401 = vunpack.c.l.b16 %v1046
        %v1402 = vunpack.c.h.b16 %v1046
        %v1403 = vunpack.c.l.b16 %v1047
        %v1404 = vunpack.c.h.b16 %v1047
        %v1405 = vunpack.c.l.b16 %v1048
        %v1406 = vunpack.c.h.b16 %v1048
        %v1407 = vunpack.c.l.b16 %v1049
        %v1408 = vunpack.c.h.b16 %v1049
        %v1409 = vunpack.c.l.b16 %v1050
        %v1410 = vunpack.c.h.b16 %v1050
        %v1411 = vunpack.c.l.b16 %v1051
        %v1412 = vunpack.c.h.b16 %v1051
        %v1413 = vunpack.c.l.b16 %v1052
        %v1414 = vunpack.c.h.b16 %v1052
        %v1415 = vunpack.c.l.b16 %v1053
        %v1416 = vunpack.c.h.b16 %v1053
        %v1417 = vunpack.c.l.b16 %v1054
        %v1418 = vunpack.c.h.b16 %v1054
        %v1419 = vunpack.c.l.b16 %v1055
        %v1420 = vunpack.c.h.b16 %v1055
        %v1421 = vunpack.c.l.b16 %v1056
        %v1422 = vunpack.c.h.b16 %v1056
        %v1423 = vunpack.c.l.b16 %v1057
        %v1424 = vunpack.c.h.b16 %v1057
        %v1425 = vunpack.c.l.b16 %v1058
        %v1426 = vunpack.c.h.b16 %v1058
        %v1427 = vunpack.c.l.b16 %v1059
        %v1428 = vunpack.c.h.b16 %v1059
        %v1429 = vunpack.c.l.b16 %v1060
        %v1430 = vunpack.c.h.b16 %v1060
        %v1431 = vunpack.c.l.b16 %v1061
        %v1432 = vunpack.c.h.b16 %v1061
        %v1433 = vunpack.c.l.b16 %v1062
        %v1434 = vunpack.c.h.b16 %v1062
        %v1435 = vunpack.c.l.b16 %v1063
        %v1436 = vunpack.c.h.b16 %v1063
        %v1437 = vunpack.c.l.b16 %v1064
        %v1438 = vunpack.c.h.b16 %v1064
        %v1439 = vunpack.c.l.b16 %v1065
        %v1440 = vunpack.c.h.b16 %v1065
        %v1441 = vunpack.c.l.b16 %v1066
        %v1442 = vunpack.c.h.b16 %v1066
        %v1443 = vunpack.c.l.b16 %v1067
        %v1444 = vunpack.c.h.b16 %v1067
        %v1445 = vunpack.c.l.b16 %v1068
        %v1446 = vunpack.c.h.b16 %v1068
        %v1447 = vunpack.c.l.b16 %v1069
        %v1448 = vunpack.c.h.b16 %v1069
        %v1449 = vunpack.c.l.b16 %v1070
        %v1450 = vunpack.c.h.b16 %v1070
        %v1451 = vunpack.c.l.b16 %v1071
        %v1452 = vunpack.c.h.b16 %v1071
        %v1453 = vunpack.c.l.b16 %v1072
        %v1454 = vunpack.c.h.b16 %v1072
        %v1455 = vunpack.c.l.b16 %v1073
        %v1456 = vunpack.c.h.b16 %v1073
        %v1457 = vunpack.c.l.b16 %v1074
        %v1458 = vunpack.c.h.b16 %v1074
        %v1459 = vunpack.c.l.b16 %v1075
        %v1460 = vunpack.c.h.b16 %v1075
        %v1461 = vunpack.c.l.b16 %v1076
        %v1462 = vunpack.c.h.b16 %v1076
        %v1463 = vunpack.c.l.b16 %v1077
        %v1464 = vunpack.c.h.b16 %v1077
        %v1465 = vunpack.c.l.b16 %v1078
        %v1466 = vunpack.c.h.b16 %v1078
        %v1467 = vunpack.c.l.b16 %v1079
        %v1468 = vunpack.c.h.b16 %v1079
        %v1469 = vunpack.c.l.b16 %v1080
        %v1470 = vunpack.c.h.b16 %v1080
        %v1471 = vunpack.c.l.b16 %v1081
        %v1472 = vunpack.c.h.b16 %v1081
        %v1473 = vunpack.c.l.b16 %v1082
        %v1474 = vunpack.c.h.b16 %v1082
        %v1475 = vunpack.c.l.b16 %v1083
        %v1476 = vunpack.c.h.b16 %v1083
        %v1477 = vunpack.c.l.b16 %v1084
        %v1478 = vunpack.c.h.b16 %v1084
        %v1479 = vunpack.c.l.b16 %v1085
        %v1480 = vunpack.c.h.b16 %v1085
        %v1481 = vunpack.c.l.b16 %v1086
        %v1482 = vunpack.c.h.b16 %v1086
        %v1483 = vunpack.c.l.b16 %v1087
        %v1484 = vunpack.c.h.b16 %v1087
        %v1485 = vunpack.c.l.b16 %v1088
        %v1486 = vunpack.c.h.b16 %v1088
        %v1487 = vunpack.c.l.b16 %v1089
        %v1488 = vunpack.c.h.b16 %v1089
        %v1489 = vunpack.c.l.b16 %v1090
        %v1490 = vunpack.c.h.b16 %v1090
        %v1491 = vunpack.c.l.b16 %v1091
        %v1492 = vunpack.c.h.b16 %v1091
        %v1493 = vunpack.c.l.b16 %v1092
        %v1494 = vunpack.c.h.b16 %v1092
        %v1495 = vunpack.c.l.b16 %v1093
        %v1496 = vunpack.c.h.b16 %v1093
        %v1497 = vunpack.c.l.b16 %v1094
        %v1498 = vunpack.c.h.b16 %v1094
        %v1499 = vunpack.c.l.b16 %v1095
        %v1500 = vunpack.c.h.b16 %v1095
        %v1501 = vunpack.c.l.b16 %v1096
        %v1502 = vunpack.c.h.b16 %v1096
        %v1503 = vpack.c.b16 %v1251, %v1247
        %v1504 = vpack.c.b16 %v1252, %v1248
        %v1505 = vpack.c.b16 %v1253, %v1249
        %v1506 = vpack.c.b16 %v1254, %v1250
        %v1507 = vpack.c.b16 %v1259, %v1255
        %v1508 = vpack.c.b16 %v1260, %v1256
        %v1509 = vpack.c.b16 %v1261, %v1257
        %v1510 = vpack.c.b16 %v1262, %v1258
        %v1511 = vpack.c.b16 %v1267, %v1263
        %v1512 = vpack.c.b16 %v1268, %v1264
        %v1513 = vpack.c.b16 %v1269, %v1265
        %v1514 = vpack.c.b16 %v1270, %v1266
        %v1515 = vpack.c.b16 %v1275, %v1271
        %v1516 = vpack.c.b16 %v1276, %v1272
        %v1517 = vpack.c.b16 %v1277, %v1273
        %v1518 = vpack.c.b16 %v1278, %v1274
        %v1519 = vpack.c.b16 %v1283, %v1279
        %v1520 = vpack.c.b16 %v1284, %v1280
        %v1521 = vpack.c.b16 %v1285, %v1281
        %v1522 = vpack.c.b16 %v1286, %v1282
        %v1523 = vpack.c.b16 %v1291, %v1287
        %v1524 = vpack.c.b16 %v1292, %v1288
        %v1525 = vpack.c.b16 %v1293, %v1289
        %v1526 = vpack.c.b16 %v1294, %v1290
        %v1527 = vpack.c.b16 %v1299, %v1295
        %v1528 = vpack.c.b16 %v1300, %v1296
        %v1529 = vpack.c.b16 %v1301, %v1297
        %v1530 = vpack.c.b16 %v1302, %v1298
        %v1531 = vpack.c.b16 %v1307, %v1303
        %v1532 = vpack.c.b16 %v1308, %v1304
        %v1533 = vpack.c.b16 %v1309, %v1305
        %v1534 = vpack.c.b16 %v1310, %v1306
        %v1535 = vpack.c.b16 %v1315, %v1311
        %v1536 = vpack.c.b16 %v1316, %v1312
        %v1537 = vpack.c.b16 %v1317, %v1313
        %v1538 = vpack.c.b16 %v1318, %v1314
        %v1539 = vpack.c.b16 %v1323, %v1319
        %v1540 = vpack.c.b16 %v1324, %v1320
        %v1541 = vpack.c.b16 %v1325, %v1321
        %v1542 = vpack.c.b16 %v1326, %v1322
        %v1543 = vpack.c.b16 %v1331, %v1327
        %v1544 = vpack.c.b16 %v1332, %v1328
        %v1545 = vpack.c.b16 %v1333, %v1329
        %v1546 = vpack.c.b16 %v1334, %v1330
        %v1547 = vpack.c.b16 %v1339, %v1335
        %v1548 = vpack.c.b16 %v1340, %v1336
        %v1549 = vpack.c.b16 %v1341, %v1337
        %v1550 = vpack.c.b16 %v1342, %v1338
        %v1551 = vpack.c.b16 %v1347, %v1343
        %v1552 = vpack.c.b16 %v1348, %v1344
        %v1553 = vpack.c.b16 %v1349, %v1345
        %v1554 = vpack.c.b16 %v1350, %v1346
        %v1555 = vpack.c.b16 %v1355, %v1351
        %v1556 = vpack.c.b16 %v1356, %v1352
        %v1557 = vpack.c.b16 %v1357, %v1353
        %v1558 = vpack.c.b16 %v1358, %v1354
        %v1559 = vpack.c.b16 %v1363, %v1359
        %v1560 = vpack.c.b16 %v1364, %v1360
        %v1561 = vpack.c.b16 %v1365, %v1361
        %v1562 = vpack.c.b16 %v1366, %v1362
        %v1563 = vpack.c.b16 %v1371, %v1367
        %v1564 = vpack.c.b16 %v1372, %v1368
        %v1565 = vpack.c.b16 %v1373, %v1369
        %v1566 = vpack.c.b16 %v1374, %v1370
        %v1567 = vpack.c.b16 %v1379, %v1375
        %v1568 = vpack.c.b16 %v1380, %v1376
        %v1569 = vpack.c.b16 %v1381, %v1377
        %v1570 = vpack.c.b16 %v1382, %v1378
        %v1571 = vpack.c.b16 %v1387, %v1383
        %v1572 = vpack.c.b16 %v1388, %v1384
        %v1573 = vpack.c.b16 %v1389, %v1385
        %v1574 = vpack.c.b16 %v1390, %v1386
        %v1575 = vpack.c.b16 %v1395, %v1391
        %v1576 = vpack.c.b16 %v1396, %v1392
        %v1577 = vpack.c.b16 %v1397, %v1393
        %v1578 = vpack.c.b16 %v1398, %v1394
        %v1579 = vpack.c.b16 %v1403, %v1399
        %v1580 = vpack.c.b16 %v1404, %v1400
        %v1581 = vpack.c.b16 %v1405, %v1401
        %v1582 = vpack.c.b16 %v1406, %v1402
        %v1583 = vpack.c.b16 %v1411, %v1407
        %v1584 = vpack.c.b16 %v1412, %v1408
        %v1585 = vpack.c.b16 %v1413, %v1409
        %v1586 = vpack.c.b16 %v1414, %v1410
        %v1587 = vpack.c.b16 %v1419, %v1415
        %v1588 = vpack.c.b16 %v1420, %v1416
        %v1589 = vpack.c.b16 %v1421, %v1417
        %v1590 = vpack.c.b16 %v1422, %v1418
        %v1591 = vpack.c.b16 %v1427, %v1423
        %v1592 = vpack.c.b16 %v1428, %v1424
        %v1593 = vpack.c.b16 %v1429, %v1425
        %v1594 = vpack.c.b16 %v1430, %v1426
        %v1595 = vpack.c.b16 %v1435, %v1431
        %v1596 = vpack.c.b16 %v1436, %v1432
        %v1597 = vpack.c.b16 %v1437, %v1433
        %v1598 = vpack.c.b16 %v1438, %v1434
        %v1599 = vpack.c.b16 %v1443, %v1439
        %v1600 = vpack.c.b16 %v1444, %v1440
        %v1601 = vpack.c.b16 %v1445, %v1441
        %v1602 = vpack.c.b16 %v1446, %v1442
        %v1603 = vpack.c.b16 %v1451, %v1447
        %v1604 = vpack.c.b16 %v1452, %v1448
        %v1605 = vpack.c.b16 %v1453, %v1449
        %v1606 = vpack.c.b16 %v1454, %v1450
        %v1607 = vpack.c.b16 %v1459, %v1455
        %v1608 = vpack.c.b16 %v1460, %v1456
        %v1609 = vpack.c.b16 %v1461, %v1457
        %v1610 = vpack.c.b16 %v1462, %v1458
        %v1611 = vpack.c.b16 %v1467, %v1463
        %v1612 = vpack.c.b16 %v1468, %v1464
        %v1613 = vpack.c.b16 %v1469, %v1465
        %v1614 = vpack.c.b16 %v1470, %v1466
        %v1615 = vpack.c.b16 %v1475, %v1471
        %v1616 = vpack.c.b16 %v1476, %v1472
        %v1617 = vpack.c.b16 %v1477, %v1473
        %v1618 = vpack.c.b16 %v1478, %v1474
        %v1619 = vpack.c.b16 %v1483, %v1479
        %v1620 = vpack.c.b16 %v1484, %v1480
        %v1621 = vpack.c.b16 %v1485, %v1481
        %v1622 = vpack.c.b16 %v1486, %v1482
        %v1623 = vpack.c.b16 %v1491, %v1487
        %v1624 = vpack.c.b16 %v1492, %v1488
        %v1625 = vpack.c.b16 %v1493, %v1489
        %v1626 = vpack.c.b16 %v1494, %v1490
        %v1627 = vpack.c.b16 %v1499, %v1495
        %v1628 = vpack.c.b16 %v1500, %v1496
        %v1629 = vpack.c.b16 %v1501, %v1497
        %v1630 = vpack.c.b16 %v1502, %v1498
        %1759 = vmatprep.subr.bf16.mxu0 %v1532
        %1760 = vmatpush1.bf16.msra.mxu0 %v1531
        %1761 = vmatprep.subr.bf16.mxu0 %v1528
        %1762 = vmatpush1.bf16.msra.mxu0 %v1527
        %1763 = vmatprep.subr.bf16.mxu0 %v1524
        %1764 = vmatpush1.bf16.msra.mxu0 %v1523
        %1765 = vmatprep.subr.bf16.mxu0 %v1520
        %1766 = vmatpush1.bf16.msra.mxu0 %v1519
        %1767 = vmatprep.subr.bf16.mxu0 %v1516
        %1768 = vmatpush1.bf16.msra.mxu0 %v1515
        %1769 = vmatprep.subr.bf16.mxu0 %v1512
        %1770 = vmatpush1.bf16.msra.mxu0 %v1511
        %1771 = vmatprep.subr.bf16.mxu0 %v1508
        %1772 = vmatpush1.bf16.msra.mxu0 %v1507
        %1773 = vmatprep.subr.bf16.mxu0 %v1504
        %1774 = vmatpush1.bf16.msra.mxu0 %v1503
        %1775 = vmatprep.subr.bf16.mxu0 %v1564
        %1776 = vmatpush2.bf16.msra.mxu0 %v1563
        %1777 = vmatprep.subr.bf16.mxu0 %v1560
        %1778 = vmatpush2.bf16.msra.mxu0 %v1559
        %1779 = vmatprep.subr.bf16.mxu0 %v1556
        %1780 = vmatpush2.bf16.msra.mxu0 %v1555
        %1781 = vmatprep.subr.bf16.mxu0 %v1552
        %1782 = vmatpush2.bf16.msra.mxu0 %v1551
        %1783 = vmatprep.subr.bf16.mxu0 %v1548
        %1784 = vmatpush2.bf16.msra.mxu0 %v1547
        %1785 = vmatprep.subr.bf16.mxu0 %v1544
        %1786 = vmatpush2.bf16.msra.mxu0 %v1543
        %1787 = vmatprep.subr.bf16.mxu0 %v1540
        %1788 = vmatpush2.bf16.msra.mxu0 %v1539
        %1789 = vmatprep.subr.bf16.mxu0 %v1536
        %1790 = vmatpush2.bf16.msra.mxu0 %v1535
        %1791 = vmatprep.mubr.bf16.mxu0 %v958
        %1792 = vmatmul.mubr.bf16.gmra.mxu0 %v957
        %v1793 = vpop.f32.mrf.mxu0
        %v1794 = vadd.f32 %v1102, %v1793
        %v1795 = vpop.f32.mrf.mxu0
        %v1796 = vadd.f32 %v1106, %v1795
        %v1797 = vpop.f32.mrf.mxu0
        %v1798 = vadd.f32 %v1102, %v1797
        %v1799 = vpop.f32.mrf.mxu0
        %v1800 = vadd.f32 %v1106, %v1799
        %1801 = vmatprep.mubr.bf16.mxu0 %v962
        %1802 = vmatmul.mubr.bf16.gmra.mxu0 %v961
        %v1803 = vpop.f32.mrf.mxu0
        %v1804 = vadd.f32 %v1102, %v1803
        %v1805 = vpop.f32.mrf.mxu0
        %v1806 = vadd.f32 %v1106, %v1805
        %v1807 = vpop.f32.mrf.mxu0
        %v1808 = vadd.f32 %v1102, %v1807
        %v1809 = vpop.f32.mrf.mxu0
        %v1810 = vadd.f32 %v1106, %v1809
        %1811 = vmatprep.mubr.bf16.mxu0 %v966
        %1812 = vmatmul.mubr.bf16.gmra.mxu0 %v965
        %v1813 = vpop.f32.mrf.mxu0
        %v1814 = vadd.f32 %v1102, %v1813
        %v1815 = vpop.f32.mrf.mxu0
        %v1816 = vadd.f32 %v1106, %v1815
        %v1817 = vpop.f32.mrf.mxu0
        %v1818 = vpop.f32.mrf.mxu0
        %1819 = vdwg.mxu0
        %1820 = vmatprep.subr.bf16.mxu0 %v1596
        %1821 = vmatpush1.bf16.msra.mxu0 %v1595
        %1822 = vmatprep.subr.bf16.mxu0 %v1592
        %1823 = vmatpush1.bf16.msra.mxu0 %v1591
        %1824 = vmatprep.subr.bf16.mxu0 %v1588
        %1825 = vmatpush1.bf16.msra.mxu0 %v1587
        %1826 = vmatprep.subr.bf16.mxu0 %v1584
        %1827 = vmatpush1.bf16.msra.mxu0 %v1583
        %1828 = vmatprep.subr.bf16.mxu0 %v1580
        %1829 = vmatpush1.bf16.msra.mxu0 %v1579
        %1830 = vmatprep.subr.bf16.mxu0 %v1576
        %1831 = vmatpush1.bf16.msra.mxu0 %v1575
        %1832 = vmatprep.subr.bf16.mxu0 %v1572
        %1833 = vmatpush1.bf16.msra.mxu0 %v1571
        %1834 = vmatprep.subr.bf16.mxu0 %v1568
        %1835 = vmatpush1.bf16.msra.mxu0 %v1567
        %1836 = vmatprep.subr.bf16.mxu0 %v1628
        %1837 = vmatpush2.bf16.msra.mxu0 %v1627
        %1838 = vmatprep.subr.bf16.mxu0 %v1624
        %1839 = vmatpush2.bf16.msra.mxu0 %v1623
        %1840 = vmatprep.subr.bf16.mxu0 %v1620
        %1841 = vmatpush2.bf16.msra.mxu0 %v1619
        %1842 = vmatprep.subr.bf16.mxu0 %v1616
        %1843 = vmatpush2.bf16.msra.mxu0 %v1615
        %1844 = vmatprep.subr.bf16.mxu0 %v1612
        %1845 = vmatpush2.bf16.msra.mxu0 %v1611
        %1846 = vmatprep.subr.bf16.mxu0 %v1608
        %1847 = vmatpush2.bf16.msra.mxu0 %v1607
        %1848 = vmatprep.subr.bf16.mxu0 %v1604
        %1849 = vmatpush2.bf16.msra.mxu0 %v1603
        %1850 = vmatprep.subr.bf16.mxu0 %v1600
        %1851 = vmatpush2.bf16.msra.mxu0 %v1599
        %1852 = vmatprep.mubr.bf16.mxu0 %v960
        %1853 = vmatmul.mubr.bf16.gmra.mxu0 %v959
        %v1854 = vpop.f32.mrf.mxu0
        %v1855 = vadd.f32 %v1794, %v1854
        %v1856 = vpop.f32.mrf.mxu0
        %v1857 = vadd.f32 %v1796, %v1856
        %v1858 = vpop.f32.mrf.mxu0
        %v1859 = vadd.f32 %v1798, %v1858
        %v1860 = vpop.f32.mrf.mxu0
        %v1861 = vadd.f32 %v1800, %v1860
        %1862 = vmatprep.mubr.bf16.mxu0 %v964
        %1863 = vmatmul.mubr.bf16.gmra.mxu0 %v963
        %v1864 = vpop.f32.mrf.mxu0
        %v1865 = vadd.f32 %v1804, %v1864
        %v1866 = vpop.f32.mrf.mxu0
        %v1867 = vadd.f32 %v1806, %v1866
        %v1868 = vpop.f32.mrf.mxu0
        %v1869 = vadd.f32 %v1808, %v1868
        %v1870 = vpop.f32.mrf.mxu0
        %v1871 = vadd.f32 %v1810, %v1870
        %1872 = vmatprep.mubr.bf16.mxu0 %v968
        %1873 = vmatmul.mubr.bf16.gmra.mxu0 %v967
        %v1874 = vpop.f32.mrf.mxu0
        %v1875 = vadd.f32 %v1814, %v1874
        %v1876 = vpop.f32.mrf.mxu0
        %v1877 = vadd.f32 %v1816, %v1876
        %v1878 = vpop.f32.mrf.mxu0
        %v1879 = vpop.f32.mrf.mxu0
        %1880 = vdwg.mxu0
        %1881 = vmatprep.subr.bf16.mxu0 %v1534
        %1882 = vmatpush1.bf16.msra.mxu0 %v1533
        %1883 = vmatprep.subr.bf16.mxu0 %v1530
        %1884 = vmatpush1.bf16.msra.mxu0 %v1529
        %1885 = vmatprep.subr.bf16.mxu0 %v1526
        %1886 = vmatpush1.bf16.msra.mxu0 %v1525
        %1887 = vmatprep.subr.bf16.mxu0 %v1522
        %1888 = vmatpush1.bf16.msra.mxu0 %v1521
        %1889 = vmatprep.subr.bf16.mxu0 %v1518
        %1890 = vmatpush1.bf16.msra.mxu0 %v1517
        %1891 = vmatprep.subr.bf16.mxu0 %v1514
        %1892 = vmatpush1.bf16.msra.mxu0 %v1513
        %1893 = vmatprep.subr.bf16.mxu0 %v1510
        %1894 = vmatpush1.bf16.msra.mxu0 %v1509
        %1895 = vmatprep.subr.bf16.mxu0 %v1506
        %1896 = vmatpush1.bf16.msra.mxu0 %v1505
        %1897 = vmatprep.subr.bf16.mxu0 %v1566
        %1898 = vmatpush2.bf16.msra.mxu0 %v1565
        %1899 = vmatprep.subr.bf16.mxu0 %v1562
        %1900 = vmatpush2.bf16.msra.mxu0 %v1561
        %1901 = vmatprep.subr.bf16.mxu0 %v1558
        %1902 = vmatpush2.bf16.msra.mxu0 %v1557
        %1903 = vmatprep.subr.bf16.mxu0 %v1554
        %1904 = vmatpush2.bf16.msra.mxu0 %v1553
        %1905 = vmatprep.subr.bf16.mxu0 %v1550
        %1906 = vmatpush2.bf16.msra.mxu0 %v1549
        %1907 = vmatprep.subr.bf16.mxu0 %v1546
        %1908 = vmatpush2.bf16.msra.mxu0 %v1545
        %1909 = vmatprep.subr.bf16.mxu0 %v1542
        %1910 = vmatpush2.bf16.msra.mxu0 %v1541
        %1911 = vmatprep.subr.bf16.mxu0 %v1538
        %1912 = vmatpush2.bf16.msra.mxu0 %v1537
        %1913 = vmatprep.mubr.bf16.mxu0 %v958
        %1914 = vmatmul.mubr.bf16.gmra.mxu0 %v957
        %v1915 = vpop.f32.mrf.mxu0
        %v1916 = vadd.f32 %v1110, %v1915
        %v1917 = vpop.f32.mrf.mxu0
        %v1918 = vadd.f32 %v1114, %v1917
        %v1919 = vpop.f32.mrf.mxu0
        %v1920 = vadd.f32 %v1110, %v1919
        %v1921 = vpop.f32.mrf.mxu0
        %v1922 = vadd.f32 %v1114, %v1921
        %1923 = vmatprep.mubr.bf16.mxu0 %v962
        %1924 = vmatmul.mubr.bf16.gmra.mxu0 %v961
        %v1925 = vpop.f32.mrf.mxu0
        %v1926 = vadd.f32 %v1110, %v1925
        %v1927 = vpop.f32.mrf.mxu0
        %v1928 = vadd.f32 %v1114, %v1927
        %v1929 = vpop.f32.mrf.mxu0
        %v1930 = vadd.f32 %v1110, %v1929
        %v1931 = vpop.f32.mrf.mxu0
        %v1932 = vadd.f32 %v1114, %v1931
        %1933 = vmatprep.mubr.bf16.mxu0 %v966
        %1934 = vmatmul.mubr.bf16.gmra.mxu0 %v965
        %v1935 = vpop.f32.mrf.mxu0
        %v1936 = vadd.f32 %v1110, %v1935
        %v1937 = vpop.f32.mrf.mxu0
        %v1938 = vadd.f32 %v1114, %v1937
        %v1939 = vpop.f32.mrf.mxu0
        %v1940 = vpop.f32.mrf.mxu0
        %1941 = vdwg.mxu0
        %1942 = vmatprep.subr.bf16.mxu0 %v1598
        %1943 = vmatpush1.bf16.msra.mxu0 %v1597
        %1944 = vmatprep.subr.bf16.mxu0 %v1594
        %1945 = vmatpush1.bf16.msra.mxu0 %v1593
        %1946 = vmatprep.subr.bf16.mxu0 %v1590
        %1947 = vmatpush1.bf16.msra.mxu0 %v1589
        %1948 = vmatprep.subr.bf16.mxu0 %v1586
        %1949 = vmatpush1.bf16.msra.mxu0 %v1585
        %1950 = vmatprep.subr.bf16.mxu0 %v1582
        %1951 = vmatpush1.bf16.msra.mxu0 %v1581
        %1952 = vmatprep.subr.bf16.mxu0 %v1578
        %1953 = vmatpush1.bf16.msra.mxu0 %v1577
        %1954 = vmatprep.subr.bf16.mxu0 %v1574
        %1955 = vmatpush1.bf16.msra.mxu0 %v1573
        %1956 = vmatprep.subr.bf16.mxu0 %v1570
        %1957 = vmatpush1.bf16.msra.mxu0 %v1569
        %1958 = vmatprep.subr.bf16.mxu0 %v1630
        %1959 = vmatpush2.bf16.msra.mxu0 %v1629
        %1960 = vmatprep.subr.bf16.mxu0 %v1626
        %1961 = vmatpush2.bf16.msra.mxu0 %v1625
        %1962 = vmatprep.subr.bf16.mxu0 %v1622
        %1963 = vmatpush2.bf16.msra.mxu0 %v1621
        %1964 = vmatprep.subr.bf16.mxu0 %v1618
        %1965 = vmatpush2.bf16.msra.mxu0 %v1617
        %1966 = vmatprep.subr.bf16.mxu0 %v1614
        %1967 = vmatpush2.bf16.msra.mxu0 %v1613
        %1968 = vmatprep.subr.bf16.mxu0 %v1610
        %1969 = vmatpush2.bf16.msra.mxu0 %v1609
        %1970 = vmatprep.subr.bf16.mxu0 %v1606
        %1971 = vmatpush2.bf16.msra.mxu0 %v1605
        %1972 = vmatprep.subr.bf16.mxu0 %v1602
        %1973 = vmatpush2.bf16.msra.mxu0 %v1601
        %1974 = vmatprep.mubr.bf16.mxu0 %v960
        %1975 = vmatmul.mubr.bf16.gmra.mxu0 %v959
        %v1976 = vpop.f32.mrf.mxu0
        %v1977 = vadd.f32 %v1916, %v1976
        %v1978 = vpop.f32.mrf.mxu0
        %v1979 = vadd.f32 %v1918, %v1978
        %v1980 = vpop.f32.mrf.mxu0
        %v1981 = vadd.f32 %v1920, %v1980
        %v1982 = vpop.f32.mrf.mxu0
        %v1983 = vadd.f32 %v1922, %v1982
        %1984 = vmatprep.mubr.bf16.mxu0 %v964
        %1985 = vmatmul.mubr.bf16.gmra.mxu0 %v963
        %v1986 = vpop.f32.mrf.mxu0
        %v1987 = vadd.f32 %v1926, %v1986
        %v1988 = vpop.f32.mrf.mxu0
        %v1989 = vadd.f32 %v1928, %v1988
        %v1990 = vpop.f32.mrf.mxu0
        %v1991 = vadd.f32 %v1930, %v1990
        %v1992 = vpop.f32.mrf.mxu0
        %v1993 = vadd.f32 %v1932, %v1992
        %1994 = vmatprep.mubr.bf16.mxu0 %v968
        %1995 = vmatmul.mubr.bf16.gmra.mxu0 %v967
        %v1996 = vpop.f32.mrf.mxu0
        %v1997 = vadd.f32 %v1936, %v1996
        %v1998 = vpop.f32.mrf.mxu0
        %v1999 = vadd.f32 %v1938, %v1998
        %v2000 = vpop.f32.mrf.mxu0
        %v2001 = vpop.f32.mrf.mxu0
        %2002 = vdwg.mxu0
        %v2003 = vpack.c.bf16 %v948, %v947
        %v2004 = vpack.c.bf16 %v950, %v949
        %v2005 = vpack.c.bf16 %v951, %v951
        %v2006 = vld [vmem:[%s6] sm:$0xf]
        %v2007 = vld [vmem:[%s6 + $0x4] sm:$0xf]
        %v2008 = vld [vmem:[%s6 + $0x8] sm:$0xf]
        %v2009 = vld [vmem:[%s6 + $0xc] sm:$0xf]
        %v2010 = vld [vmem:[%s6 + $0x10] sm:$0xf]
        %v2011 = vld [vmem:[%s6 + $0x14] sm:$0xf]
        %v2012 = vld [vmem:[%s6 + $0x18] sm:$0xf]
        %v2013 = vld [vmem:[%s6 + $0x1c] sm:$0xf]
        %v2014 = vld [vmem:[%s6 + $0x20] sm:$0xf]
        %v2015 = vld [vmem:[%s6 + $0x24] sm:$0xf]
        %v2016 = vld [vmem:[%s6 + $0x28] sm:$0xf]
        %v2017 = vld [vmem:[%s6 + $0x2c] sm:$0xf]
        %v2018 = vld [vmem:[%s6 + $0x30] sm:$0xf]
        %v2019 = vld [vmem:[%s6 + $0x34] sm:$0xf]
        %v2020 = vld [vmem:[%s6 + $0x38] sm:$0xf]
        %v2021 = vld [vmem:[%s6 + $0x3c] sm:$0xf]
        %v2022 = vld [vmem:[%s7] sm:$0x1]
        %v2024 = vlaneseq
        %v2025 = vshrl.u32 %v2024, 7
        %v2026 = vsub.s32 0, %v2025
        %v2027 = vrot.slane %v2022, %v2026
        %v2045 = vunpack.c.l.b16 %v2006
        %v2046 = vunpack.c.l.b16 %v2007
        %v2047 = vunpack.c.l.b16 %v2008
        %v2048 = vunpack.c.l.b16 %v2009
        %v2049 = vunpack.c.l.b16 %v2010
        %v2050 = vunpack.c.l.b16 %v2011
        %v2051 = vunpack.c.l.b16 %v2012
        %v2052 = vunpack.c.l.b16 %v2013
        %v2053 = vunpack.c.l.b16 %v2014
        %v2054 = vunpack.c.l.b16 %v2015
        %v2055 = vunpack.c.l.b16 %v2016
        %v2056 = vunpack.c.l.b16 %v2017
        %v2057 = vunpack.c.l.b16 %v2018
        %v2058 = vunpack.c.l.b16 %v2019
        %v2059 = vunpack.c.l.b16 %v2020
        %v2060 = vunpack.c.l.b16 %v2021
        %v2061 = vpack.c.b16 %v2046, %v2045
        %v2062 = vpack.c.b16 %v2048, %v2047
        %v2063 = vpack.c.b16 %v2050, %v2049
        %v2064 = vpack.c.b16 %v2052, %v2051
        %v2065 = vpack.c.b16 %v2054, %v2053
        %v2066 = vpack.c.b16 %v2056, %v2055
        %v2067 = vpack.c.b16 %v2058, %v2057
        %v2068 = vpack.c.b16 %v2060, %v2059
        %2077 = vmatprep.subr.bf16.mxu0 0
        %2078 = vmatpush1.bf16.msra.mxu0 %v2068
        %2079 = vmatprep.subr.bf16.mxu0 0
        %2080 = vmatpush1.bf16.msra.mxu0 %v2067
        %2081 = vmatprep.subr.bf16.mxu0 0
        %2082 = vmatpush1.bf16.msra.mxu0 %v2066
        %2083 = vmatprep.subr.bf16.mxu0 0
        %2084 = vmatpush1.bf16.msra.mxu0 %v2065
        %2085 = vmatprep.subr.bf16.mxu0 0
        %2086 = vmatpush1.bf16.msra.mxu0 %v2064
        %2087 = vmatprep.subr.bf16.mxu0 0
        %2088 = vmatpush1.bf16.msra.mxu0 %v2063
        %2089 = vmatprep.subr.bf16.mxu0 0
        %2090 = vmatpush1.bf16.msra.mxu0 %v2062
        %2091 = vmatprep.subr.bf16.mxu0 0
        %2092 = vmatpush1.bf16.msra.mxu0 %v2061
        %2093 = vmatprep.subr.bf16.mxu0 0
        %2094 = vmatpush2.bf16.msra.mxu0 0
        %2095 = vmatprep.subr.bf16.mxu0 0
        %2096 = vmatpush2.bf16.msra.mxu0 0
        %2097 = vmatprep.subr.bf16.mxu0 0
        %2098 = vmatpush2.bf16.msra.mxu0 0
        %2099 = vmatprep.subr.bf16.mxu0 0
        %2100 = vmatpush2.bf16.msra.mxu0 0
        %2101 = vmatprep.subr.bf16.mxu0 0
        %2102 = vmatpush2.bf16.msra.mxu0 0
        %2103 = vmatprep.subr.bf16.mxu0 0
        %2104 = vmatpush2.bf16.msra.mxu0 0
        %2105 = vmatprep.subr.bf16.mxu0 0
        %2106 = vmatpush2.bf16.msra.mxu0 0
        %2107 = vmatprep.subr.bf16.mxu0 0
        %2108 = vmatpush2.bf16.msra.mxu0 0
        %2109 = vmatprep.mubr.bf16.mxu0 0
        %2110 = vmatmul.mubr.bf16.gmra.mxu0 %v2003
        %v2111 = vpop.f32.mrf.mxu0
        %v2112 = vadd.f32 %v2027, %v2111
        %v2113 = vpop.f32.mrf.mxu0
        %v2114 = vpop.f32.mrf.mxu0
        %v2115 = vadd.f32 %v2027, %v2114
        %v2116 = vpop.f32.mrf.mxu0
        %2117 = vmatprep.mubr.bf16.mxu0 0
        %2118 = vmatmul.mubr.bf16.gmra.mxu0 %v2004
        %v2119 = vpop.f32.mrf.mxu0
        %v2120 = vadd.f32 %v2027, %v2119
        %v2121 = vpop.f32.mrf.mxu0
        %v2122 = vpop.f32.mrf.mxu0
        %v2123 = vadd.f32 %v2027, %v2122
        %v2124 = vpop.f32.mrf.mxu0
        %2125 = vmatprep.mubr.bf16.mxu0 0
        %2126 = vmatmul.mubr.bf16.gmra.mxu0 %v2005
        %v2127 = vpop.f32.mrf.mxu0
        %v2128 = vadd.f32 %v2027, %v2127
        %v2129 = vpop.f32.mrf.mxu0
        %v2130 = vpop.f32.mrf.mxu0
        %v2131 = vpop.f32.mrf.mxu0
        %2132 = vdwg.mxu0
        %v2133 = vld [vmem:[%s8] sm:$0x1]
        %v2135 = vlaneseq
        %v2136 = vshrl.u32 %v2135, 7
        %v2137 = vsub.s32 0, %v2136
        %v2138 = vrot.slane %v2133, %v2137
        %v2140 = vmul.f32 %v952, %v2138
        %v2141 = vmul.f32 %v953, %v2138
        %v2142 = vmul.f32 %v954, %v2138
        %v2143 = vmul.f32 %v955, %v2138
        %v2144 = vmul.f32 %v956, %v2138
        %2145 = vadd.xlane.f32.xlu0 %v2140
        %v2146 = vpop.xlane.xlu0 %2145
        %2147 = vadd.xlane.f32.xlu0 %v2141
        %v2148 = vpop.xlane.xlu0 %2147
        %2149 = vadd.xlane.f32.xlu0 %v2142
        %v2150 = vpop.xlane.xlu0 %2149
        %2151 = vadd.xlane.f32.xlu0 %v2143
        %v2152 = vpop.xlane.xlu0 %2151
        %2153 = vadd.xlane.f32.xlu0 %v2144
        %v2154 = vpop.xlane.xlu0 %2153
        %v2155 = vld [vmem:[#allocation2] sm:$0x1]
        %v2157 = vlaneseq
        %v2158 = vshrl.u32 %v2157, 7
        %v2159 = vsub.s32 0, %v2158
        %v2160 = vrot.slane %v2155, %v2159
        %v2162 = vadd.f32 %v2146, %v2160
        %v2163 = vadd.f32 %v2148, %v2160
        %v2164 = vadd.f32 %v2150, %v2160
        %v2165 = vadd.f32 %v2152, %v2160
        %v2166 = vadd.f32 %v2154, %v2160
        %v2167 = vld [vmem:[%s442] sm:$0xff]
        %v2168 = vld [vmem:[%s442 + $0x8] sm:$0xff]
        %v2169 = vld [vmem:[%s442 + $0x10] sm:$0xff]
        %v2170 = vld [vmem:[%s442 + $0x18] sm:$0xff]
        %v2171 = vld [vmem:[%s442 + $0x20] sm:$0xff]
        %v2172 = vpack.c.bf16 %v2168, %v2167
        %v2173 = vpack.c.bf16 %v2170, %v2169
        %v2174 = vpack.c.bf16 %v2171, %v2171
        %v2175 = vld [vmem:[%s10] sm:$0xff]
        %v2176 = vld [vmem:[%s10 + $0x8] sm:$0xff]
        %v2177 = vld [vmem:[%s10 + $0x10] sm:$0xff]
        %v2178 = vld [vmem:[%s10 + $0x18] sm:$0xff]
        %v2183 = vunpack.c.l.b16 %v2175
        %v2184 = vunpack.c.h.b16 %v2175
        %v2185 = vunpack.c.l.b16 %v2176
        %v2186 = vunpack.c.h.b16 %v2176
        %v2187 = vunpack.c.l.b16 %v2177
        %v2188 = vunpack.c.h.b16 %v2177
        %v2189 = vunpack.c.l.b16 %v2178
        %v2190 = vunpack.c.h.b16 %v2178
        %v2191 = vpack.c.b16 %v2187, %v2183
        %v2192 = vpack.c.b16 %v2188, %v2184
        %v2193 = vpack.c.b16 %v2189, %v2185
        %v2194 = vpack.c.b16 %v2190, %v2186
        %vm2195 = vcmask 121856
        %v2197 = vsel %vm2195, %v2172, 0
        %v2200 = vsel %vm2195, %v2173, 0
        %v2203 = vsel %vm2195, %v2174, 0
        %vm2205 = vcmask 1046528
        %vm2206 = vcmask 1047552
        %v2207 = vsel %vm2205, 4294967295, 65535
        %v2208 = vsel %vm2206, %v2207, 0
        %v2210 = vand.u32 %v2191, %v2208
        %v2213 = vand.u32 %v2192, %v2208
        %v2216 = vand.u32 %v2193, %v2208
        %v2219 = vand.u32 %v2194, %v2208
        %2221 = vmatprep.subr.bf16.mxu0 0
        %2222 = vmatpush1.bf16.msra.mxu0 0
        %2223 = vmatprep.subr.bf16.mxu0 0
        %2224 = vmatpush1.bf16.msra.mxu0 0
        %2225 = vmatprep.subr.bf16.mxu0 0
        %2226 = vmatpush1.bf16.msra.mxu0 0
        %2227 = vmatprep.subr.bf16.mxu0 0
        %2228 = vmatpush1.bf16.msra.mxu0 0
        %2229 = vmatprep.subr.bf16.mxu0 0
        %2230 = vmatpush1.bf16.msra.mxu0 0
        %2231 = vmatprep.subr.bf16.mxu0 0
        %2232 = vmatpush1.bf16.msra.mxu0 0
        %2233 = vmatprep.subr.bf16.mxu0 0
        %2234 = vmatpush1.bf16.msra.mxu0 0
        %2235 = vmatprep.subr.bf16.mxu0 %v2213
        %2236 = vmatpush1.bf16.msra.mxu0 %v2210
        %2237 = vmatprep.subr.bf16.mxu0 0
        %2238 = vmatpush2.bf16.msra.mxu0 0
        %2239 = vmatprep.subr.bf16.mxu0 0
        %2240 = vmatpush2.bf16.msra.mxu0 0
        %2241 = vmatprep.subr.bf16.mxu0 0
        %2242 = vmatpush2.bf16.msra.mxu0 0
        %2243 = vmatprep.subr.bf16.mxu0 0
        %2244 = vmatpush2.bf16.msra.mxu0 0
        %2245 = vmatprep.subr.bf16.mxu0 0
        %2246 = vmatpush2.bf16.msra.mxu0 0
        %2247 = vmatprep.subr.bf16.mxu0 0
        %2248 = vmatpush2.bf16.msra.mxu0 0
        %2249 = vmatprep.subr.bf16.mxu0 0
        %2250 = vmatpush2.bf16.msra.mxu0 0
        %2251 = vmatprep.subr.bf16.mxu0 0
        %2252 = vmatpush2.bf16.msra.mxu0 0
        %2253 = vmatprep.mubr.bf16.mxu0 0
        %2254 = vmatmul.mubr.bf16.gmra.mxu0 %v2197
        %v2255 = vpop.f32.mrf.mxu0
        %v2256 = vadd.f32 0.0, %v2255
        %v2257 = vpop.f32.mrf.mxu0
        %v2258 = vadd.f32 0.0, %v2257
        %v2259 = vpop.f32.mrf.mxu0
        %v2260 = vadd.f32 0.0, %v2259
        %v2261 = vpop.f32.mrf.mxu0
        %v2262 = vadd.f32 0.0, %v2261
        %2263 = vmatprep.mubr.bf16.mxu0 0
        %2264 = vmatmul.mubr.bf16.gmra.mxu0 %v2200
        %v2265 = vpop.f32.mrf.mxu0
        %v2266 = vadd.f32 0.0, %v2265
        %v2267 = vpop.f32.mrf.mxu0
        %v2268 = vadd.f32 0.0, %v2267
        %v2269 = vpop.f32.mrf.mxu0
        %v2270 = vadd.f32 0.0, %v2269
        %v2271 = vpop.f32.mrf.mxu0
        %v2272 = vadd.f32 0.0, %v2271
        %2273 = vmatprep.mubr.bf16.mxu0 0
        %2274 = vmatmul.mubr.bf16.gmra.mxu0 %v2203
        %v2275 = vpop.f32.mrf.mxu0
        %v2276 = vadd.f32 0.0, %v2275
        %v2277 = vpop.f32.mrf.mxu0
        %v2278 = vadd.f32 0.0, %v2277
        %v2279 = vpop.f32.mrf.mxu0
        %v2280 = vpop.f32.mrf.mxu0
        %2281 = vdwg.mxu0
        %2282 = vmatprep.subr.bf16.mxu0 0
        %2283 = vmatpush1.bf16.msra.mxu0 0
        %2284 = vmatprep.subr.bf16.mxu0 0
        %2285 = vmatpush1.bf16.msra.mxu0 0
        %2286 = vmatprep.subr.bf16.mxu0 0
        %2287 = vmatpush1.bf16.msra.mxu0 0
        %2288 = vmatprep.subr.bf16.mxu0 0
        %2289 = vmatpush1.bf16.msra.mxu0 0
        %2290 = vmatprep.subr.bf16.mxu0 0
        %2291 = vmatpush1.bf16.msra.mxu0 0
        %2292 = vmatprep.subr.bf16.mxu0 0
        %2293 = vmatpush1.bf16.msra.mxu0 0
        %2294 = vmatprep.subr.bf16.mxu0 0
        %2295 = vmatpush1.bf16.msra.mxu0 0
        %2296 = vmatprep.subr.bf16.mxu0 %v2219
        %2297 = vmatpush1.bf16.msra.mxu0 %v2216
        %2298 = vmatprep.subr.bf16.mxu0 0
        %2299 = vmatpush2.bf16.msra.mxu0 0
        %2300 = vmatprep.subr.bf16.mxu0 0
        %2301 = vmatpush2.bf16.msra.mxu0 0
        %2302 = vmatprep.subr.bf16.mxu0 0
        %2303 = vmatpush2.bf16.msra.mxu0 0
        %2304 = vmatprep.subr.bf16.mxu0 0
        %2305 = vmatpush2.bf16.msra.mxu0 0
        %2306 = vmatprep.subr.bf16.mxu0 0
        %2307 = vmatpush2.bf16.msra.mxu0 0
        %2308 = vmatprep.subr.bf16.mxu0 0
        %2309 = vmatpush2.bf16.msra.mxu0 0
        %2310 = vmatprep.subr.bf16.mxu0 0
        %2311 = vmatpush2.bf16.msra.mxu0 0
        %2312 = vmatprep.subr.bf16.mxu0 0
        %2313 = vmatpush2.bf16.msra.mxu0 0
        %2314 = vmatprep.mubr.bf16.mxu0 0
        %2315 = vmatmul.mubr.bf16.gmra.mxu0 %v2197
        %v2316 = vpop.f32.mrf.mxu0
        %v2317 = vadd.f32 0.0, %v2316
        %v2318 = vpop.f32.mrf.mxu0
        %v2319 = vadd.f32 0.0, %v2318
        %v2320 = vpop.f32.mrf.mxu0
        %v2321 = vadd.f32 0.0, %v2320
        %v2322 = vpop.f32.mrf.mxu0
        %v2323 = vadd.f32 0.0, %v2322
        %2324 = vmatprep.mubr.bf16.mxu0 0
        %2325 = vmatmul.mubr.bf16.gmra.mxu0 %v2200
        %v2326 = vpop.f32.mrf.mxu0
        %v2327 = vadd.f32 0.0, %v2326
        %v2328 = vpop.f32.mrf.mxu0
        %v2329 = vadd.f32 0.0, %v2328
        %v2330 = vpop.f32.mrf.mxu0
        %v2331 = vadd.f32 0.0, %v2330
        %v2332 = vpop.f32.mrf.mxu0
        %v2333 = vadd.f32 0.0, %v2332
        %2334 = vmatprep.mubr.bf16.mxu0 0
        %2335 = vmatmul.mubr.bf16.gmra.mxu0 %v2203
        %v2336 = vpop.f32.mrf.mxu0
        %v2337 = vadd.f32 0.0, %v2336
        %v2338 = vpop.f32.mrf.mxu0
        %v2339 = vadd.f32 0.0, %v2338
        %v2340 = vpop.f32.mrf.mxu0
        %v2341 = vpop.f32.mrf.mxu0
        %2342 = vdwg.mxu0
        %v2343 = vmul.f32 %v2256, %v1855
        %v2344 = vmul.f32 %v2258, %v1857
        %v2345 = vmul.f32 %v2317, %v1977
        %v2346 = vmul.f32 %v2319, %v1979
        %v2347 = vmul.f32 %v2260, %v1859
        %v2348 = vmul.f32 %v2262, %v1861
        %v2349 = vmul.f32 %v2321, %v1981
        %v2350 = vmul.f32 %v2323, %v1983
        %v2351 = vmul.f32 %v2266, %v1865
        %v2352 = vmul.f32 %v2268, %v1867
        %v2353 = vmul.f32 %v2327, %v1987
        %v2354 = vmul.f32 %v2329, %v1989
        %v2355 = vmul.f32 %v2270, %v1869
        %v2356 = vmul.f32 %v2272, %v1871
        %v2357 = vmul.f32 %v2331, %v1991
        %v2358 = vmul.f32 %v2333, %v1993
        %v2359 = vmul.f32 %v2276, %v1875
        %v2360 = vmul.f32 %v2278, %v1877
        %v2361 = vmul.f32 %v2337, %v1997
        %v2362 = vmul.f32 %v2339, %v1999
        %v2363 = vpack.c.bf16 %v2347, %v2343
        %v2364 = vpack.c.bf16 %v2348, %v2344
        %v2365 = vpack.c.bf16 %v2349, %v2345
        %v2366 = vpack.c.bf16 %v2350, %v2346
        %v2367 = vpack.c.bf16 %v2355, %v2351
        %v2368 = vpack.c.bf16 %v2356, %v2352
        %v2369 = vpack.c.bf16 %v2357, %v2353
        %v2370 = vpack.c.bf16 %v2358, %v2354
        %v2371 = vpack.c.bf16 %v2359, %v2359
        %v2372 = vpack.c.bf16 %v2360, %v2360
        %v2373 = vpack.c.bf16 %v2361, %v2361
        %v2374 = vpack.c.bf16 %v2362, %v2362
        %v2375 = vld [vmem:[%s11] sm:$0xf]
        %v2376 = vld [vmem:[%s11 + $0x4] sm:$0xf]
        %v2377 = vld [vmem:[%s11 + $0x8] sm:$0xf]
        %v2378 = vld [vmem:[%s11 + $0xc] sm:$0xf]
        %v2379 = vld [vmem:[%s11 + $0x10] sm:$0xf]
        %v2380 = vld [vmem:[%s11 + $0x14] sm:$0xf]
        %v2381 = vld [vmem:[%s11 + $0x18] sm:$0xf]
        %v2382 = vld [vmem:[%s11 + $0x1c] sm:$0xf]
        %v2383 = vld [vmem:[%s11 + $0x20] sm:$0xf]
        %v2384 = vld [vmem:[%s11 + $0x24] sm:$0xf]
        %v2385 = vld [vmem:[%s11 + $0x28] sm:$0xf]
        %v2386 = vld [vmem:[%s11 + $0x2c] sm:$0xf]
        %v2387 = vld [vmem:[%s11 + $0x30] sm:$0xf]
        %v2388 = vld [vmem:[%s11 + $0x34] sm:$0xf]
        %v2389 = vld [vmem:[%s11 + $0x38] sm:$0xf]
        %v2390 = vld [vmem:[%s11 + $0x3c] sm:$0xf]
        %v2391 = vld [vmem:[%s11 + $0x40] sm:$0xf]
        %v2392 = vld [vmem:[%s11 + $0x44] sm:$0xf]
        %v2393 = vld [vmem:[%s11 + $0x48] sm:$0xf]
        %v2394 = vld [vmem:[%s11 + $0x4c] sm:$0xf]
        %v2395 = vld [vmem:[%s11 + $0x50] sm:$0xf]
        %v2396 = vld [vmem:[%s11 + $0x54] sm:$0xf]
        %v2397 = vld [vmem:[%s11 + $0x58] sm:$0xf]
        %v2398 = vld [vmem:[%s11 + $0x5c] sm:$0xf]
        %v2399 = vld [vmem:[%s11 + $0x60] sm:$0xf]
        %v2400 = vld [vmem:[%s11 + $0x64] sm:$0xf]
        %v2401 = vld [vmem:[%s11 + $0x68] sm:$0xf]
        %v2402 = vld [vmem:[%s11 + $0x6c] sm:$0xf]
        %v2403 = vld [vmem:[%s11 + $0x70] sm:$0xf]
        %v2404 = vld [vmem:[%s11 + $0x74] sm:$0xf]
        %v2405 = vld [vmem:[%s11 + $0x78] sm:$0xf]
        %v2406 = vld [vmem:[%s11 + $0x7c] sm:$0xf]
        %v2407 = vld [vmem:[%s11 + $0x80] sm:$0xf]
        %v2408 = vld [vmem:[%s11 + $0x84] sm:$0xf]
        %v2409 = vld [vmem:[%s11 + $0x88] sm:$0xf]
        %v2410 = vld [vmem:[%s11 + $0x8c] sm:$0xf]
        %v2411 = vld [vmem:[%s11 + $0x90] sm:$0xf]
        %v2412 = vld [vmem:[%s11 + $0x94] sm:$0xf]
        %v2413 = vld [vmem:[%s11 + $0x98] sm:$0xf]
        %v2414 = vld [vmem:[%s11 + $0x9c] sm:$0xf]
        %v2415 = vld [vmem:[%s11 + $0xa0] sm:$0xf]
        %v2416 = vld [vmem:[%s11 + $0xa4] sm:$0xf]
        %v2417 = vld [vmem:[%s11 + $0xa8] sm:$0xf]
        %v2418 = vld [vmem:[%s11 + $0xac] sm:$0xf]
        %v2419 = vld [vmem:[%s11 + $0xb0] sm:$0xf]
        %v2420 = vld [vmem:[%s11 + $0xb4] sm:$0xf]
        %v2421 = vld [vmem:[%s11 + $0xb8] sm:$0xf]
        %v2422 = vld [vmem:[%s11 + $0xbc] sm:$0xf]
        %v2423 = vld [vmem:[%s11 + $0xc0] sm:$0xf]
        %v2424 = vld [vmem:[%s11 + $0xc4] sm:$0xf]
        %v2425 = vld [vmem:[%s11 + $0xc8] sm:$0xf]
        %v2426 = vld [vmem:[%s11 + $0xcc] sm:$0xf]
        %v2427 = vld [vmem:[%s11 + $0xd0] sm:$0xf]
        %v2428 = vld [vmem:[%s11 + $0xd4] sm:$0xf]
        %v2429 = vld [vmem:[%s11 + $0xd8] sm:$0xf]
        %v2430 = vld [vmem:[%s11 + $0xdc] sm:$0xf]
        %v2431 = vld [vmem:[%s11 + $0xe0] sm:$0xf]
        %v2432 = vld [vmem:[%s11 + $0xe4] sm:$0xf]
        %v2433 = vld [vmem:[%s11 + $0xe8] sm:$0xf]
        %v2434 = vld [vmem:[%s11 + $0xec] sm:$0xf]
        %v2435 = vld [vmem:[%s11 + $0xf0] sm:$0xf]
        %v2436 = vld [vmem:[%s11 + $0xf4] sm:$0xf]
        %v2437 = vld [vmem:[%s11 + $0xf8] sm:$0xf]
        %v2438 = vld [vmem:[%s11 + $0xfc] sm:$0xf]
        %v2503 = vunpack.c.l.b16 %v2375
        %v2504 = vunpack.c.l.b16 %v2376
        %v2505 = vunpack.c.l.b16 %v2377
        %v2506 = vunpack.c.l.b16 %v2378
        %v2507 = vunpack.c.l.b16 %v2379
        %v2508 = vunpack.c.l.b16 %v2380
        %v2509 = vunpack.c.l.b16 %v2381
        %v2510 = vunpack.c.l.b16 %v2382
        %v2511 = vunpack.c.l.b16 %v2383
        %v2512 = vunpack.c.l.b16 %v2384
        %v2513 = vunpack.c.l.b16 %v2385
        %v2514 = vunpack.c.l.b16 %v2386
        %v2515 = vunpack.c.l.b16 %v2387
        %v2516 = vunpack.c.l.b16 %v2388
        %v2517 = vunpack.c.l.b16 %v2389
        %v2518 = vunpack.c.l.b16 %v2390
        %v2519 = vunpack.c.l.b16 %v2391
        %v2520 = vunpack.c.l.b16 %v2392
        %v2521 = vunpack.c.l.b16 %v2393
        %v2522 = vunpack.c.l.b16 %v2394
        %v2523 = vunpack.c.l.b16 %v2395
        %v2524 = vunpack.c.l.b16 %v2396
        %v2525 = vunpack.c.l.b16 %v2397
        %v2526 = vunpack.c.l.b16 %v2398
        %v2527 = vunpack.c.l.b16 %v2399
        %v2528 = vunpack.c.l.b16 %v2400
        %v2529 = vunpack.c.l.b16 %v2401
        %v2530 = vunpack.c.l.b16 %v2402
        %v2531 = vunpack.c.l.b16 %v2403
        %v2532 = vunpack.c.l.b16 %v2404
        %v2533 = vunpack.c.l.b16 %v2405
        %v2534 = vunpack.c.l.b16 %v2406
        %v2535 = vunpack.c.l.b16 %v2407
        %v2536 = vunpack.c.l.b16 %v2408
        %v2537 = vunpack.c.l.b16 %v2409
        %v2538 = vunpack.c.l.b16 %v2410
        %v2539 = vunpack.c.l.b16 %v2411
        %v2540 = vunpack.c.l.b16 %v2412
        %v2541 = vunpack.c.l.b16 %v2413
        %v2542 = vunpack.c.l.b16 %v2414
        %v2543 = vunpack.c.l.b16 %v2415
        %v2544 = vunpack.c.l.b16 %v2416
        %v2545 = vunpack.c.l.b16 %v2417
        %v2546 = vunpack.c.l.b16 %v2418
        %v2547 = vunpack.c.l.b16 %v2419
        %v2548 = vunpack.c.l.b16 %v2420
        %v2549 = vunpack.c.l.b16 %v2421
        %v2550 = vunpack.c.l.b16 %v2422
        %v2551 = vunpack.c.l.b16 %v2423
        %v2552 = vunpack.c.l.b16 %v2424
        %v2553 = vunpack.c.l.b16 %v2425
        %v2554 = vunpack.c.l.b16 %v2426
        %v2555 = vunpack.c.l.b16 %v2427
        %v2556 = vunpack.c.l.b16 %v2428
        %v2557 = vunpack.c.l.b16 %v2429
        %v2558 = vunpack.c.l.b16 %v2430
        %v2559 = vunpack.c.l.b16 %v2431
        %v2560 = vunpack.c.l.b16 %v2432
        %v2561 = vunpack.c.l.b16 %v2433
        %v2562 = vunpack.c.l.b16 %v2434
        %v2563 = vunpack.c.l.b16 %v2435
        %v2564 = vunpack.c.l.b16 %v2436
        %v2565 = vunpack.c.l.b16 %v2437
        %v2566 = vunpack.c.l.b16 %v2438
        %v2567 = vpack.c.b16 %v2504, %v2503
        %v2568 = vpack.c.b16 %v2506, %v2505
        %v2569 = vpack.c.b16 %v2508, %v2507
        %v2570 = vpack.c.b16 %v2510, %v2509
        %v2571 = vpack.c.b16 %v2512, %v2511
        %v2572 = vpack.c.b16 %v2514, %v2513
        %v2573 = vpack.c.b16 %v2516, %v2515
        %v2574 = vpack.c.b16 %v2518, %v2517
        %v2575 = vpack.c.b16 %v2520, %v2519
        %v2576 = vpack.c.b16 %v2522, %v2521
        %v2577 = vpack.c.b16 %v2524, %v2523
        %v2578 = vpack.c.b16 %v2526, %v2525
        %v2579 = vpack.c.b16 %v2528, %v2527
        %v2580 = vpack.c.b16 %v2530, %v2529
        %v2581 = vpack.c.b16 %v2532, %v2531
        %v2582 = vpack.c.b16 %v2534, %v2533
        %v2583 = vpack.c.b16 %v2536, %v2535
        %v2584 = vpack.c.b16 %v2538, %v2537
        %v2585 = vpack.c.b16 %v2540, %v2539
        %v2586 = vpack.c.b16 %v2542, %v2541
        %v2587 = vpack.c.b16 %v2544, %v2543
        %v2588 = vpack.c.b16 %v2546, %v2545
        %v2589 = vpack.c.b16 %v2548, %v2547
        %v2590 = vpack.c.b16 %v2550, %v2549
        %v2591 = vpack.c.b16 %v2552, %v2551
        %v2592 = vpack.c.b16 %v2554, %v2553
        %v2593 = vpack.c.b16 %v2556, %v2555
        %v2594 = vpack.c.b16 %v2558, %v2557
        %v2595 = vpack.c.b16 %v2560, %v2559
        %v2596 = vpack.c.b16 %v2562, %v2561
        %v2597 = vpack.c.b16 %v2564, %v2563
        %v2598 = vpack.c.b16 %v2566, %v2565
        %2631 = vmatprep.subr.bf16.mxu0 0
        %2632 = vmatpush1.bf16.msra.mxu0 %v2574
        %2633 = vmatprep.subr.bf16.mxu0 0
        %2634 = vmatpush1.bf16.msra.mxu0 %v2573
        %2635 = vmatprep.subr.bf16.mxu0 0
        %2636 = vmatpush1.bf16.msra.mxu0 %v2572
        %2637 = vmatprep.subr.bf16.mxu0 0
        %2638 = vmatpush1.bf16.msra.mxu0 %v2571
        %2639 = vmatprep.subr.bf16.mxu0 0
        %2640 = vmatpush1.bf16.msra.mxu0 %v2570
        %2641 = vmatprep.subr.bf16.mxu0 0
        %2642 = vmatpush1.bf16.msra.mxu0 %v2569
        %2643 = vmatprep.subr.bf16.mxu0 0
        %2644 = vmatpush1.bf16.msra.mxu0 %v2568
        %2645 = vmatprep.subr.bf16.mxu0 0
        %2646 = vmatpush1.bf16.msra.mxu0 %v2567
        %2647 = vmatprep.subr.bf16.mxu0 0
        %2648 = vmatpush2.bf16.msra.mxu0 %v2582
        %2649 = vmatprep.subr.bf16.mxu0 0
        %2650 = vmatpush2.bf16.msra.mxu0 %v2581
        %2651 = vmatprep.subr.bf16.mxu0 0
        %2652 = vmatpush2.bf16.msra.mxu0 %v2580
        %2653 = vmatprep.subr.bf16.mxu0 0
        %2654 = vmatpush2.bf16.msra.mxu0 %v2579
        %2655 = vmatprep.subr.bf16.mxu0 0
        %2656 = vmatpush2.bf16.msra.mxu0 %v2578
        %2657 = vmatprep.subr.bf16.mxu0 0
        %2658 = vmatpush2.bf16.msra.mxu0 %v2577
        %2659 = vmatprep.subr.bf16.mxu0 0
        %2660 = vmatpush2.bf16.msra.mxu0 %v2576
        %2661 = vmatprep.subr.bf16.mxu0 0
        %2662 = vmatpush2.bf16.msra.mxu0 %v2575
        %2663 = vmatprep.mubr.bf16.mxu0 %v2364
        %2664 = vmatmul.mubr.bf16.gmra.mxu0 %v2363
        %v2665 = vpop.f32.mrf.mxu0
        %v2666 = vadd.f32 %v847, %v2665
        %v2667 = vpop.f32.mrf.mxu0
        %v2668 = vpop.f32.mrf.mxu0
        %v2669 = vadd.f32 %v851, %v2668
        %v2670 = vpop.f32.mrf.mxu0
        %2671 = vmatprep.mubr.bf16.mxu0 %v2368
        %2672 = vmatmul.mubr.bf16.gmra.mxu0 %v2367
        %v2673 = vpop.f32.mrf.mxu0
        %v2674 = vadd.f32 %v857, %v2673
        %v2675 = vpop.f32.mrf.mxu0
        %v2676 = vpop.f32.mrf.mxu0
        %v2677 = vadd.f32 %v861, %v2676
        %v2678 = vpop.f32.mrf.mxu0
        %2679 = vmatprep.mubr.bf16.mxu0 %v2372
        %2680 = vmatmul.mubr.bf16.gmra.mxu0 %v2371
        %v2681 = vpop.f32.mrf.mxu0
        %v2682 = vadd.f32 %v867, %v2681
        %v2683 = vpop.f32.mrf.mxu0
        %v2684 = vpop.f32.mrf.mxu0
        %v2685 = vpop.f32.mrf.mxu0
        %2686 = vdwg.mxu0
        %2687 = vmatprep.subr.bf16.mxu0 0
        %2688 = vmatpush1.bf16.msra.mxu0 %v2590
        %2689 = vmatprep.subr.bf16.mxu0 0
        %2690 = vmatpush1.bf16.msra.mxu0 %v2589
        %2691 = vmatprep.subr.bf16.mxu0 0
        %2692 = vmatpush1.bf16.msra.mxu0 %v2588
        %2693 = vmatprep.subr.bf16.mxu0 0
        %2694 = vmatpush1.bf16.msra.mxu0 %v2587
        %2695 = vmatprep.subr.bf16.mxu0 0
        %2696 = vmatpush1.bf16.msra.mxu0 %v2586
        %2697 = vmatprep.subr.bf16.mxu0 0
        %2698 = vmatpush1.bf16.msra.mxu0 %v2585
        %2699 = vmatprep.subr.bf16.mxu0 0
        %2700 = vmatpush1.bf16.msra.mxu0 %v2584
        %2701 = vmatprep.subr.bf16.mxu0 0
        %2702 = vmatpush1.bf16.msra.mxu0 %v2583
        %2703 = vmatprep.subr.bf16.mxu0 0
        %2704 = vmatpush2.bf16.msra.mxu0 %v2598
        %2705 = vmatprep.subr.bf16.mxu0 0
        %2706 = vmatpush2.bf16.msra.mxu0 %v2597
        %2707 = vmatprep.subr.bf16.mxu0 0
        %2708 = vmatpush2.bf16.msra.mxu0 %v2596
        %2709 = vmatprep.subr.bf16.mxu0 0
        %2710 = vmatpush2.bf16.msra.mxu0 %v2595
        %2711 = vmatprep.subr.bf16.mxu0 0
        %2712 = vmatpush2.bf16.msra.mxu0 %v2594
        %2713 = vmatprep.subr.bf16.mxu0 0
        %2714 = vmatpush2.bf16.msra.mxu0 %v2593
        %2715 = vmatprep.subr.bf16.mxu0 0
        %2716 = vmatpush2.bf16.msra.mxu0 %v2592
        %2717 = vmatprep.subr.bf16.mxu0 0
        %2718 = vmatpush2.bf16.msra.mxu0 %v2591
        %2719 = vmatprep.mubr.bf16.mxu0 %v2366
        %2720 = vmatmul.mubr.bf16.gmra.mxu0 %v2365
        %v2721 = vpop.f32.mrf.mxu0
        %v2722 = vadd.f32 %v2666, %v2721
        %v2723 = vpop.f32.mrf.mxu0
        %v2724 = vpop.f32.mrf.mxu0
        %v2725 = vadd.f32 %v2669, %v2724
        %v2726 = vpop.f32.mrf.mxu0
        %2727 = vmatprep.mubr.bf16.mxu0 %v2370
        %2728 = vmatmul.mubr.bf16.gmra.mxu0 %v2369
        %v2729 = vpop.f32.mrf.mxu0
        %v2730 = vadd.f32 %v2674, %v2729
        %v2731 = vpop.f32.mrf.mxu0
        %v2732 = vpop.f32.mrf.mxu0
        %v2733 = vadd.f32 %v2677, %v2732
        %v2734 = vpop.f32.mrf.mxu0
        %2735 = vmatprep.mubr.bf16.mxu0 %v2374
        %2736 = vmatmul.mubr.bf16.gmra.mxu0 %v2373
        %v2737 = vpop.f32.mrf.mxu0
        %v2738 = vadd.f32 %v2682, %v2737
        %v2739 = vpop.f32.mrf.mxu0
        %v2740 = vpop.f32.mrf.mxu0
        %v2741 = vpop.f32.mrf.mxu0
        %2742 = vdwg.mxu0
        %v2743 = vmax.f32 %v2722, 0.0
        %v2744 = vmax.f32 %v2725, 0.0
        %v2745 = vmax.f32 %v2730, 0.0
        %v2746 = vmax.f32 %v2733, 0.0
        %v2747 = vmax.f32 %v2738, 0.0
        %v2748 = vmul.f32 %v2743, %v2112
        %v2749 = vmul.f32 %v2744, %v2115
        %v2750 = vmul.f32 %v2745, %v2120
        %v2751 = vmul.f32 %v2746, %v2123
        %v2752 = vmul.f32 %v2747, %v2128
        %2753 = vadd.xlane.f32.xlu0 %v2748
        %v2754 = vpop.xlane.xlu0 %2753
        %2755 = vadd.xlane.f32.xlu0 %v2749
        %v2756 = vpop.xlane.xlu0 %2755
        %2757 = vadd.xlane.f32.xlu0 %v2750
        %v2758 = vpop.xlane.xlu0 %2757
        %2759 = vadd.xlane.f32.xlu0 %v2751
        %v2760 = vpop.xlane.xlu0 %2759
        %2761 = vadd.xlane.f32.xlu0 %v2752
        %v2762 = vpop.xlane.xlu0 %2761
        %v2763 = vadd.f32 %v2754, %v2162
        %v2764 = vadd.f32 %v2756, %v2163
        %v2765 = vadd.f32 %v2758, %v2164
        %v2766 = vadd.f32 %v2760, %v2165
        %v2767 = vadd.f32 %v2762, %v2166
        %vm2768 = vcmask 7168
        %2769 = vst.msk [vmem:[%s454] sm:$0xff] %vm2768, %v2763
        %2770 = vst.msk [vmem:[%s454 + $0x8] sm:$0xff] %vm2768, %v2764
        %2771 = vst.msk [vmem:[%s454 + $0x10] sm:$0xff] %vm2768, %v2765
        %2772 = vst.msk [vmem:[%s454 + $0x18] sm:$0xff] %vm2768, %v2766
        %2773 = vst.msk [vmem:[%s454 + $0x20] sm:$0xff] %vm2768, %v2767
        %s2774 = smul.u32 5, %s26
        %p2775 = scmp.lt.s32.totalorder %s2774, 9
        %s2776 = scalar_select %p2775, %s2774, 9
        %s2777 = smul.addr %s2776, 8
        %s2778 = scalar_lea.vmem %s12, %s2777
        // Predicated region
        $region73: #{lica_critic_forward.1} parent=67 // pred_check
          %p2779 = pneg %p306
        $region74: #{lica_critic_forward.1} parent=67 // pred_check_branch
          %2781 = sbr.rel (%p2779) target = $region76
        $region75: #{lica_critic_forward.1} parent=67 // pred_region
          %s2782 = smul.u32 5, %s26
        $region76: #{lica_critic_forward.1} parent=67 // pred_fallthru
          _
      $region68: #{lica_critic_forward.1} parent=5 // pred_fallthru
        _
      %p2783 = scmp.le.s32.totalorder 2, %s21
      // Predicated region
      $region77: #{lica_critic_forward.1} parent=5 // pred_check
        %p2784 = pneg %p2783
      $region78: #{lica_critic_forward.1} parent=5 // pred_check_branch
        %2786 = sbr.rel (%p2784) target = $region80
      $region79: #{lica_critic_forward.1} parent=5 // pred_region
        %s2787 = ssub.s32 %s21, 2
        // Predicated region
        $region81: #{lica_critic_forward.1} parent=79 // pred_check
          %p2788 = pneg %p312
        $region82: #{lica_critic_forward.1} parent=79 // pred_check_branch
          %2790 = sbr.rel (%p2788) target = $region84
        $region83: #{lica_critic_forward.1} parent=79 // pred_region
          %s2791 = smul.u32 5, %s27
          %p2792 = scmp.lt.s32.totalorder %s2791, 9
          %s2793 = scalar_select %p2792, %s2791, 9
          %s2794 = smul.addr %s2793, 8
          %s2795 = scalar_lea.vmem %s12, %s2794
        $region84: #{lica_critic_forward.1} parent=79 // pred_fallthru
          _
      $region80: #{lica_critic_forward.1} parent=5 // pred_fallthru
        _
    $region6: #{lica_critic_forward.1} parent=1 // loop_footer
      %s25 = sadd.s32 1, %s21
    $region7: #{lica_critic_forward.1} parent=1 // loop_footer_branch
      %20 = sbr.rel target = $region3
    $region8: #{lica_critic_forward.1} parent=1 // loop_exit
      _
    %2796 = vsyncpa [#allocation4], 1
    %s2797 = scalar_lea.sflag [#allocation4], 1
    %2798 = vsyncpa %s2797, 1

</llo_original>
